<compile_context>
chip_gen: v6e
topology: v6e:2x2x1
jax: 0.10.0
libtpu: 0.0.40
codegen_flags: <defaults>
</compile_context>

<pallas_src>
import functools

import numpy as np
import jax
import jax.numpy as jnp
from jax.experimental import pallas as pl
from jax.experimental.pallas import tpu as pltpu


# Neighbor offsets (di, dj) per guidance channel, derived from the eight ZeroPad2d
# paddings in the PyTorch code (relative to the cropped interior):
_OFFSETS = ((1, 1), (1, 0), (1, -1),
            (0, 1),         (0, -1),
            (-1, 1), (-1, 0), (-1, -1))


def _cspn_kernel(*refs, prop_time, tile_h, halo, th2, wp,
                 has_mask, col_mask, use_abs):
    """One (batch, row-tile) grid point.  Inputs arrive as raw HBM refs; this body
    DMAs an overlapping halo window of th2 = tile_h + 2*halo rows into VMEM."""
    if has_mask:
        (g_hbm, d_hbm, s_hbm, o_ref,
         g_buf, d_buf, s_buf, gates_ref, sem) = refs
    else:
        (g_hbm, d_hbm, o_ref,
         g_buf, d_buf, gates_ref, sem) = refs
        s_hbm = s_buf = None

    f32 = jnp.float32
    b = pl.program_id(0)
    t = pl.program_id(1)
    row0 = pl.multiple_of(t * tile_h, 8)      # window start (rows) in padded input

    # ---- manual DMA of this tile's halo window: rows [row0, row0 + th2) --------
    cp_g = pltpu.make_async_copy(
        g_hbm.at[b, :, pl.ds(row0, th2), :], g_buf, sem.at[0])
    cp_d = pltpu.make_async_copy(
        d_hbm.at[b, :, pl.ds(row0, th2), :], d_buf, sem.at[1])
    cp_g.start()
    cp_d.start()
    if has_mask:
        cp_s = pltpu.make_async_copy(
            s_hbm.at[b, :, pl.ds(row0, th2), :], s_buf, sem.at[2])
        cp_s.start()
    cp_g.wait()

    # ---- one-time gate precompute (single guidance traversal) -------------------
    if col_mask:
        # W is an exact lane multiple -> no zero column halo; mask the gates ONCE.
        cidx = jax.lax.broadcasted_iota(jnp.int32, (th2, wp), 1)
        cmask_p = (cidx < wp - 1).astype(f32)     # neighbor at dj = +1 exists
        cmask_m = (cidx > 0).astype(f32)          # neighbor at dj = -1 exists

    def shifted_gate(k, di, dj):
        # v[i, j] = gate_k[i + di, j + dj]  (zero outside the image)
        v = g_buf[k].astype(f32)
        if use_abs:
            v = jnp.abs(v)                        # '8sum_abs'
        if di != 0:
            v = pltpu.roll(v, shift=(-di) % th2, axis=0)   # XLU sublane rotate
        if dj != 0:
            v = pltpu.roll(v, shift=(-dj) % wp, axis=1)    # XLU lane rotate
            if col_mask:
                v = v * (cmask_p if dj > 0 else cmask_m)
        return v

    sg = [shifted_gate(k, di, dj) for k, (di, dj) in enumerate(_OFFSETS)]
    ag = sg if use_abs else [jnp.abs(v) for v in sg]
    asum = ((ag[0] + ag[1]) + (ag[2] + ag[3])) + ((ag[4] + ag[5]) + (ag[6] + ag[7]))
    gsum = asum if use_abs else (
        ((sg[0] + sg[1]) + (sg[2] + sg[3])) + ((sg[4] + sg[5]) + (sg[6] + sg[7])))

    # Guarded reciprocal: abs_sum == 0 -> 0 (PyTorch would NaN/Inf in that case).
    inv = jnp.where(asum == 0.0, 0.0, 1.0 / jnp.where(asum == 0.0, 1.0, asum))

    # Normalized, pre-shifted, pre-masked gates -> VMEM scratch (inv folded in).
    for k in range(8):
        gates_ref[k] = sg[k] * inv

    # ---- hoisted affine term (d/s DMA hidden behind the gate pass) ---------------
    cp_d.wait()
    raw = d_buf[0].astype(f32)
    base = (1.0 - gsum * inv) * raw
    if has_mask:
        cp_s.wait()
        smask = jnp.sign(s_buf[0].astype(f32))
        one_minus_m = 1.0 - smask
        base = one_minus_m * base + smask * raw   # per step: base + (1-m)*acc

    # ---- CSPN propagation: 8 rolls + 8 mul + 8 add per step ----------------------
    def cshift(x, dj):
        return pltpu.roll(x, shift=(-dj) % wp, axis=1)

    result = raw
    for _ in range(prop_time):
        r_up = pltpu.roll(result, shift=th2 - 1, axis=0)   # result[i+1, j]
        r_dn = pltpu.roll(result, shift=1, axis=0)         # result[i-1, j]
        acc = (((gates_ref[0] * cshift(r_up, 1) + gates_ref[1] * r_up)
                + (gates_ref[2] * cshift(r_up, -1) + gates_ref[3] * cshift(result, 1)))
               + ((gates_ref[4] * cshift(result, -1) + gates_ref[5] * cshift(r_dn, 1))
                + (gates_ref[6] * r_dn + gates_ref[7] * cshift(r_dn, -1))))
        if has_mask:
            result = base + one_minus_m * acc
        else:
            result = base + acc

    # Write only the clean interior rows (halo is 8-aligned -> aligned slice).
    o_ref[0, 0] = result[halo:halo + tile_h, :].astype(o_ref.dtype)


def affinity_propagate(guidance, blur_depth, sparse_depth=None, *,
                       prop_time=3, prop_kernel=3, norm_type='8sum',
                       tile_h=64, guidance_dtype=None):
    assert prop_kernel == 3, 'this version only supports 8 (3x3 - 1) neighborhood'
    assert norm_type in ('8sum', '8sum_abs')
    B, C, H, W = guidance.shape
    assert C == 8
    assert blur_depth.shape == (B, 1, H, W)
    has_mask = sparse_depth is not None
    if has_mask:
        assert sparse_depth.shape == (B, 1, H, W)

    # ---- layout: lane-pad W, row-tile H with a zero halo -------------------------
    Wp = ((W + 127) // 128) * 128
    pad_w = Wp - W
    col_mask = (pad_w == 0)                 # no zero-column halo -> mask gates once

    halo = max(8, 8 * ((prop_time + 7) // 8))        # >= prop_time, multiple of 8
    tile_h = max(8, (int(tile_h) // 8) * 8)
    tile_h = min(tile_h, 8 * ((H + 7) // 8))
    n_tiles = (H + tile_h - 1) // tile_h
    Hp_out = n_tiles * tile_h
    Hp_in = Hp_out + 2 * halo
    th2 = tile_h + 2 * halo

    pad_top = halo
    pad_bot = Hp_in - H - halo

    def prep(x, dtype=None):
        if dtype is not None and x.dtype != dtype:
            x = x.astype(dtype)             # e.g. bf16 guidance in HBM
        return jnp.pad(x, ((0, 0), (0, 0), (pad_top, pad_bot), (0, pad_w)))

    g = prep(guidance, guidance_dtype)
    d = prep(blur_depth)
    s = prep(sparse_depth) if has_mask else None

    kernel = functools.partial(
        _cspn_kernel, prop_time=prop_time, tile_h=tile_h, halo=halo,
        th2=th2, wp=Wp, has_mask=has_mask, col_mask=col_mask,
        use_abs=('abs' in norm_type))

    in_specs = [pl.BlockSpec(memory_space=pl.ANY),      # guidance stays in HBM
                pl.BlockSpec(memory_space=pl.ANY)]      # blur_depth stays in HBM
    inputs = [g, d]
    if has_mask:
        in_specs.append(pl.BlockSpec(memory_space=pl.ANY))
        inputs.append(s)

    scratch = [
        pltpu.VMEM((8, th2, Wp), g.dtype),              # raw guidance window
        pltpu.VMEM((1, th2, Wp), d.dtype),              # depth window
    ]
    if has_mask:
        scratch.append(pltpu.VMEM((1, th2, Wp), s.dtype))
    scratch += [
        pltpu.VMEM((8, th2, Wp), jnp.float32),          # pre-shifted normalized gates
        pltpu.SemaphoreType.DMA((3 if has_mask else 2,)),
    ]

    bytes_in = B * n_tiles * th2 * Wp * (
        8 * g.dtype.itemsize + d.dtype.itemsize +
        (s.dtype.itemsize if has_mask else 0))
    bytes_out = B * Hp_out * Wp * 4
    cost = pl.CostEstimate(
        flops=int(B * n_tiles * th2 * Wp * (40 + 18 * prop_time)),
        transcendentals=0,
        bytes_accessed=int(bytes_in + bytes_out))

    out = pl.pallas_call(
        kernel,
        out_shape=jax.ShapeDtypeStruct((B, 1, Hp_out, Wp), jnp.float32),
        grid_spec=pltpu.PrefetchScalarGridSpec(
            num_scalar_prefetch=0,
            grid=(B, n_tiles),
            in_specs=in_specs,
            out_specs=pl.BlockSpec((1, 1, tile_h, Wp), lambda b, t: (b, 0, t, 0)),
            scratch_shapes=scratch),
        compiler_params=pltpu.CompilerParams(
            dimension_semantics=("parallel", "parallel"),
            vmem_limit_bytes=32 * 1024 * 1024),
        cost_estimate=cost,
    )(*inputs)

    return out[:, :, :H, :W]


# ---- pure-JAX reference that literally mirrors the PyTorch code -----------------
def _ref_affinity_propagate(guidance, blur_depth, sparse_depth=None, *,
                            prop_time=3, norm_type='8sum'):
    # (left, right, top, bottom) as in nn.ZeroPad2d
    pads = [(0, 2, 0, 2), (1, 1, 0, 2), (2, 0, 0, 2),
            (0, 2, 1, 1), (2, 0, 1, 1),
            (0, 2, 2, 0), (1, 1, 2, 0), (2, 0, 2, 0)]

    def pad8(x):  # x: (B,1,H,W) -> (B,8,1,H+2,W+2)
        outs = []
        for (l, r, t, b) in pads:
            outs.append(jnp.pad(x, ((0, 0), (0, 0), (t, b), (l, r)))[:, None])
        return jnp.concatenate(outs, axis=1)

    g = jnp.abs(guidance) if 'abs' in norm_type else guidance
    gate_wb = jnp.concatenate(
        [jnp.pad(g[:, k:k + 1], ((0, 0), (0, 0), (t, b), (l, r)))[:, None]
         for k, (l, r, t, b) in enumerate(pads)], axis=1)        # (B,8,1,H+2,W+2)
    abs_weight = jnp.sum(jnp.abs(gate_wb), axis=1, keepdims=True)
    gate_wb = gate_wb / abs_weight
    gate_sum = jnp.sum(gate_wb, axis=1)[:, :, 1:-1, 1:-1]        # (B,1,H,W)

    raw = blur_depth
    result = blur_depth
    mask = jnp.sign(sparse_depth) if sparse_depth is not None else None
    for _ in range(prop_time):
        dp = pad8(result)                                        # (B,8,1,H+2,W+2)
        nws = jnp.sum(gate_wb * dp, axis=1)[:, :, 1:-1, 1:-1]    # (B,1,H,W)
        result = (1.0 - gate_sum) * raw + nws
        if mask is not None:
            result = (1.0 - mask) * result + mask * raw
    return result


if __name__ == "__main__":
    key = jax.random.PRNGKey(0)
    prop_time = 3

    # 1) dense path, small image (single row tile, lane-padded W).
    B, H, W = 2, 16, 16
    kg, kd, ks, kv, k2, k3 = jax.random.split(key, 6)
    guidance = jax.random.normal(kg, (B, 8, H, W), dtype=jnp.float32)
    blur_depth = jax.random.normal(kd, (B, 1, H, W), dtype=jnp.float32)

    out = jax.block_until_ready(
        affinity_propagate(guidance, blur_depth, None, prop_time=prop_time))
    ref = _ref_affinity_propagate(guidance, blur_depth, None, prop_time=prop_time)
    np.testing.assert_allclose(np.asarray(out), np.asarray(ref), rtol=1e-4, atol=1e-5)

    # 2) sparse-replacement path.
    sparse = jnp.where(jax.random.uniform(ks, (B, 1, H, W)) > 0.7,
                       jax.random.normal(kv, (B, 1, H, W), dtype=jnp.float32), 0.0)
    out_s = jax.block_until_ready(
        affinity_propagate(guidance, blur_depth, sparse, prop_time=prop_time))
    ref_s = _ref_affinity_propagate(guidance, blur_depth, sparse, prop_time=prop_time)
    np.testing.assert_allclose(np.asarray(out_s), np.asarray(ref_s), rtol=1e-4, atol=1e-5)

    # 3) W already a multiple of 128 (one-time in-kernel column masks) + '8sum_abs'.
    kg2, kd2 = jax.random.split(k2)
    g2 = jax.random.normal(kg2, (1, 8, 8, 128), dtype=jnp.float32)
    d2 = jax.random.normal(kd2, (1, 1, 8, 128), dtype=jnp.float32)
    out2 = jax.block_until_ready(
        affinity_propagate(g2, d2, None, prop_time=2, norm_type='8sum_abs'))
    ref2 = _ref_affinity_propagate(g2, d2, None, prop_time=2, norm_type='8sum_abs')
    np.testing.assert_allclose(np.asarray(out2), np.asarray(ref2), rtol=1e-4, atol=1e-5)

    # 4) multi row-tile path (grid=(B, n_tiles)) with halo, sparse mask, padded W.
    kg3, kd3, ks3a, ks3b = jax.random.split(k3, 4)
    H3, W3 = 40, 200
    g3 = jax.random.normal(kg3, (1, 8, H3, W3), dtype=jnp.float32)
    d3 = jax.random.normal(kd3, (1, 1, H3, W3), dtype=jnp.float32)
    s3 = jnp.where(jax.random.uniform(ks3a, (1, 1, H3, W3)) > 0.5,
                   jax.random.normal(ks3b, (1, 1, H3, W3), dtype=jnp.float32), 0.0)
    out3 = jax.block_until_ready(
        affinity_propagate(g3, d3, s3, prop_time=4, tile_h=16))
    ref3 = _ref_affinity_propagate(g3, d3, s3, prop_time=4)
    np.testing.assert_allclose(np.asarray(out3), np.asarray(ref3), rtol=1e-4, atol=1e-5)

    # 5) bf16 guidance in HBM (bandwidth/VMEM knob); math stays f32 in-kernel.
    out_bf = jax.block_until_ready(
        affinity_propagate(guidance, blur_depth, None, prop_time=prop_time,
                           guidance_dtype=jnp.bfloat16))
    ref_bf = _ref_affinity_propagate(
        guidance.astype(jnp.bfloat16).astype(jnp.float32), blur_depth, None,
        prop_time=prop_time)
    np.testing.assert_allclose(np.asarray(out_bf), np.asarray(ref_bf),
                               rtol=1e-4, atol=1e-5)

    print("KERNEL_OK")
</pallas_src>

<mosaic_0001>
module attributes {stable_mosaic.version = 11 : i64} {
  func.func @_cspn_kernel(%arg0: i32, %arg1: i32, %arg2: memref<2x8x32x128xf32, #tpu.memory_space<any>>, %arg3: memref<2x1x32x128xf32, #tpu.memory_space<any>>, %arg4: memref<1x1x16x128xf32, #tpu.memory_space<vmem>>, %arg5: memref<8x32x128xf32, #tpu.memory_space<vmem>>, %arg6: memref<1x32x128xf32, #tpu.memory_space<vmem>>, %arg7: memref<8x32x128xf32, #tpu.memory_space<vmem>>, %arg8: memref<2x!tpu.dma_semaphore, #tpu.memory_space<semaphore_mem>>) attributes {dimension_semantics = [#tpu.dimension_semantics<parallel>, #tpu.dimension_semantics<parallel>], iteration_bounds = array<i64: 2, 1>, scalar_prefetch = 0 : i64, scratch_operands = 4 : i64, tpu.core_type = #tpu.core_type<tc>, window_params = [{}, {}, {transform_indices = @transform_2, window_bounds = array<i64: 1, 1, 16, 128>}]} {
    %c16_i32 = arith.constant 16 : i32
    %0 = arith.muli %arg1, %c16_i32 : i32
    %1 = tpu.assume_multiple %0, 8 : i32
    %c0_i32 = arith.constant 0 : i32
    %c0_i32_0 = arith.constant 0 : i32
    %c0_i32_1 = arith.constant 0 : i32
    %2 = tpu.memref_slice %arg2[%arg0, %c0_i32_0, %1, %c0_i32_1] : memref<2x8x32x128xf32, #tpu.memory_space<any>> -> memref<1x8x32x128xf32, #tpu.memory_space<any>>
    %3 = tpu.memref_squeeze %2 : memref<1x8x32x128xf32, #tpu.memory_space<any>> -> memref<8x32x128xf32, #tpu.memory_space<any>>
    %4 = tpu.memref_slice %arg8[%c0_i32] : memref<2x!tpu.dma_semaphore, #tpu.memory_space<semaphore_mem>> -> memref<1x!tpu.dma_semaphore, #tpu.memory_space<semaphore_mem>>
    %5 = tpu.memref_squeeze %4 : memref<1x!tpu.dma_semaphore, #tpu.memory_space<semaphore_mem>> -> memref<!tpu.dma_semaphore, #tpu.memory_space<semaphore_mem>>
    tpu.enqueue_dma source(%3 : memref<8x32x128xf32, #tpu.memory_space<any>>) target(%arg5 : memref<8x32x128xf32, #tpu.memory_space<vmem>>) target_semaphore(%5 : memref<!tpu.dma_semaphore, #tpu.memory_space<semaphore_mem>>)
    %c1_i32 = arith.constant 1 : i32
    %c0_i32_2 = arith.constant 0 : i32
    %c0_i32_3 = arith.constant 0 : i32
    %6 = tpu.memref_slice %arg3[%arg0, %c0_i32_2, %1, %c0_i32_3] : memref<2x1x32x128xf32, #tpu.memory_space<any>> -> memref<1x1x32x128xf32, #tpu.memory_space<any>>
    %7 = tpu.memref_squeeze %6 : memref<1x1x32x128xf32, #tpu.memory_space<any>> -> memref<1x32x128xf32, #tpu.memory_space<any>>
    %8 = tpu.memref_slice %arg8[%c1_i32] : memref<2x!tpu.dma_semaphore, #tpu.memory_space<semaphore_mem>> -> memref<1x!tpu.dma_semaphore, #tpu.memory_space<semaphore_mem>>
    %9 = tpu.memref_squeeze %8 : memref<1x!tpu.dma_semaphore, #tpu.memory_space<semaphore_mem>> -> memref<!tpu.dma_semaphore, #tpu.memory_space<semaphore_mem>>
    tpu.enqueue_dma source(%7 : memref<1x32x128xf32, #tpu.memory_space<any>>) target(%arg6 : memref<1x32x128xf32, #tpu.memory_space<vmem>>) target_semaphore(%9 : memref<!tpu.dma_semaphore, #tpu.memory_space<semaphore_mem>>)
    %c0_i32_4 = arith.constant 0 : i32
    %c0_i32_5 = arith.constant 0 : i32
    %c0_i32_6 = arith.constant 0 : i32
    %10 = tpu.memref_slice %arg2[%arg0, %c0_i32_5, %1, %c0_i32_6] : memref<2x8x32x128xf32, #tpu.memory_space<any>> -> memref<1x8x32x128xf32, #tpu.memory_space<any>>
    %11 = tpu.memref_squeeze %10 : memref<1x8x32x128xf32, #tpu.memory_space<any>> -> memref<8x32x128xf32, #tpu.memory_space<any>>
    %12 = tpu.memref_slice %arg8[%c0_i32_4] : memref<2x!tpu.dma_semaphore, #tpu.memory_space<semaphore_mem>> -> memref<1x!tpu.dma_semaphore, #tpu.memory_space<semaphore_mem>>
    %13 = tpu.memref_squeeze %12 : memref<1x!tpu.dma_semaphore, #tpu.memory_space<semaphore_mem>> -> memref<!tpu.dma_semaphore, #tpu.memory_space<semaphore_mem>>
    tpu.wait_dma2 semaphore(%13 : memref<!tpu.dma_semaphore, #tpu.memory_space<semaphore_mem>>) src(%11 : memref<8x32x128xf32, #tpu.memory_space<any>>) dst(%arg5 : memref<8x32x128xf32, #tpu.memory_space<vmem>>)
    %c0 = arith.constant 0 : index
    %c0_7 = arith.constant 0 : index
    %c0_8 = arith.constant 0 : index
    %14 = vector.load %arg5[%c0, %c0_7, %c0_8] : memref<8x32x128xf32, #tpu.memory_space<vmem>>, vector<1x32x128xf32>
    %15 = vector.shape_cast %14 : vector<1x32x128xf32> to vector<32x128xf32>
    %c31_i32 = arith.constant 31 : i32
    %16 = tpu.dynamic_rotate %15 by %c31_i32 dim 0 : vector<32x128xf32>, i32 -> vector<32x128xf32>
    %c127_i32 = arith.constant 127 : i32
    %17 = tpu.dynamic_rotate %16 by %c127_i32 dim 1 : vector<32x128xf32>, i32 -> vector<32x128xf32>
    %c1 = arith.constant 1 : index
    %c0_9 = arith.constant 0 : index
    %c0_10 = arith.constant 0 : index
    %18 = vector.load %arg5[%c1, %c0_9, %c0_10] : memref<8x32x128xf32, #tpu.memory_space<vmem>>, vector<1x32x128xf32>
    %19 = vector.shape_cast %18 : vector<1x32x128xf32> to vector<32x128xf32>
    %c31_i32_11 = arith.constant 31 : i32
    %20 = tpu.dynamic_rotate %19 by %c31_i32_11 dim 0 : vector<32x128xf32>, i32 -> vector<32x128xf32>
    %c2 = arith.constant 2 : index
    %c0_12 = arith.constant 0 : index
    %c0_13 = arith.constant 0 : index
    %21 = vector.load %arg5[%c2, %c0_12, %c0_13] : memref<8x32x128xf32, #tpu.memory_space<vmem>>, vector<1x32x128xf32>
    %22 = vector.shape_cast %21 : vector<1x32x128xf32> to vector<32x128xf32>
    %c31_i32_14 = arith.constant 31 : i32
    %23 = tpu.dynamic_rotate %22 by %c31_i32_14 dim 0 : vector<32x128xf32>, i32 -> vector<32x128xf32>
    %c1_i32_15 = arith.constant 1 : i32
    %24 = tpu.dynamic_rotate %23 by %c1_i32_15 dim 1 : vector<32x128xf32>, i32 -> vector<32x128xf32>
    %c3 = arith.constant 3 : index
    %c0_16 = arith.constant 0 : index
    %c0_17 = arith.constant 0 : index
    %25 = vector.load %arg5[%c3, %c0_16, %c0_17] : memref<8x32x128xf32, #tpu.memory_space<vmem>>, vector<1x32x128xf32>
    %26 = vector.shape_cast %25 : vector<1x32x128xf32> to vector<32x128xf32>
    %c127_i32_18 = arith.constant 127 : i32
    %27 = tpu.dynamic_rotate %26 by %c127_i32_18 dim 1 : vector<32x128xf32>, i32 -> vector<32x128xf32>
    %c4 = arith.constant 4 : index
    %c0_19 = arith.constant 0 : index
    %c0_20 = arith.constant 0 : index
    %28 = vector.load %arg5[%c4, %c0_19, %c0_20] : memref<8x32x128xf32, #tpu.memory_space<vmem>>, vector<1x32x128xf32>
    %29 = vector.shape_cast %28 : vector<1x32x128xf32> to vector<32x128xf32>
    %c1_i32_21 = arith.constant 1 : i32
    %30 = tpu.dynamic_rotate %29 by %c1_i32_21 dim 1 : vector<32x128xf32>, i32 -> vector<32x128xf32>
    %c5 = arith.constant 5 : index
    %c0_22 = arith.constant 0 : index
    %c0_23 = arith.constant 0 : index
    %31 = vector.load %arg5[%c5, %c0_22, %c0_23] : memref<8x32x128xf32, #tpu.memory_space<vmem>>, vector<1x32x128xf32>
    %32 = vector.shape_cast %31 : vector<1x32x128xf32> to vector<32x128xf32>
    %c1_i32_24 = arith.constant 1 : i32
    %33 = tpu.dynamic_rotate %32 by %c1_i32_24 dim 0 : vector<32x128xf32>, i32 -> vector<32x128xf32>
    %c127_i32_25 = arith.constant 127 : i32
    %34 = tpu.dynamic_rotate %33 by %c127_i32_25 dim 1 : vector<32x128xf32>, i32 -> vector<32x128xf32>
    %c6 = arith.constant 6 : index
    %c0_26 = arith.constant 0 : index
    %c0_27 = arith.constant 0 : index
    %35 = vector.load %arg5[%c6, %c0_26, %c0_27] : memref<8x32x128xf32, #tpu.memory_space<vmem>>, vector<1x32x128xf32>
    %36 = vector.shape_cast %35 : vector<1x32x128xf32> to vector<32x128xf32>
    %c1_i32_28 = arith.constant 1 : i32
    %37 = tpu.dynamic_rotate %36 by %c1_i32_28 dim 0 : vector<32x128xf32>, i32 -> vector<32x128xf32>
    %c7 = arith.constant 7 : index
    %c0_29 = arith.constant 0 : index
    %c0_30 = arith.constant 0 : index
    %38 = vector.load %arg5[%c7, %c0_29, %c0_30] : memref<8x32x128xf32, #tpu.memory_space<vmem>>, vector<1x32x128xf32>
    %39 = vector.shape_cast %38 : vector<1x32x128xf32> to vector<32x128xf32>
    %c1_i32_31 = arith.constant 1 : i32
    %40 = tpu.dynamic_rotate %39 by %c1_i32_31 dim 0 : vector<32x128xf32>, i32 -> vector<32x128xf32>
    %c1_i32_32 = arith.constant 1 : i32
    %41 = tpu.dynamic_rotate %40 by %c1_i32_32 dim 1 : vector<32x128xf32>, i32 -> vector<32x128xf32>
    %42 = math.absf %17 : vector<32x128xf32>
    %43 = math.absf %20 : vector<32x128xf32>
    %44 = math.absf %24 : vector<32x128xf32>
    %45 = math.absf %27 : vector<32x128xf32>
    %46 = math.absf %30 : vector<32x128xf32>
    %47 = math.absf %34 : vector<32x128xf32>
    %48 = math.absf %37 : vector<32x128xf32>
    %49 = math.absf %41 : vector<32x128xf32>
    %50 = arith.addf %42, %43 : vector<32x128xf32>
    %51 = arith.addf %44, %45 : vector<32x128xf32>
    %52 = arith.addf %50, %51 : vector<32x128xf32>
    %53 = arith.addf %46, %47 : vector<32x128xf32>
    %54 = arith.addf %48, %49 : vector<32x128xf32>
    %55 = arith.addf %53, %54 : vector<32x128xf32>
    %56 = arith.addf %52, %55 : vector<32x128xf32>
    %57 = arith.addf %17, %20 : vector<32x128xf32>
    %58 = arith.addf %24, %27 : vector<32x128xf32>
    %59 = arith.addf %57, %58 : vector<32x128xf32>
    %60 = arith.addf %30, %34 : vector<32x128xf32>
    %61 = arith.addf %37, %41 : vector<32x128xf32>
    %62 = arith.addf %60, %61 : vector<32x128xf32>
    %63 = arith.addf %59, %62 : vector<32x128xf32>
    %cst = arith.constant 0.000000e+00 : f32
    %64 = vector.broadcast %cst : f32 to vector<32x128xf32>
    %65 = arith.cmpf oeq, %56, %64 : vector<32x128xf32>
    %cst_33 = arith.constant 0.000000e+00 : f32
    %66 = vector.broadcast %cst_33 : f32 to vector<32x128xf32>
    %67 = arith.cmpf oeq, %56, %66 : vector<32x128xf32>
    %cst_34 = arith.constant 1.000000e+00 : f32
    %68 = vector.broadcast %cst_34 : f32 to vector<32x128xf32>
    %69 = arith.select %67, %68, %56 : vector<32x128xi1>, vector<32x128xf32>
    %cst_35 = arith.constant 1.000000e+00 : f32
    %70 = vector.broadcast %cst_35 : f32 to vector<32x128xf32>
    %71 = arith.divf %70, %69 : vector<32x128xf32>
    %cst_36 = arith.constant 0.000000e+00 : f32
    %72 = vector.broadcast %cst_36 : f32 to vector<32x128xf32>
    %73 = arith.select %65, %72, %71 : vector<32x128xi1>, vector<32x128xf32>
    %74 = arith.mulf %17, %73 : vector<32x128xf32>
    %c0_37 = arith.constant 0 : index
    %c0_38 = arith.constant 0 : index
    %c0_39 = arith.constant 0 : index
    %75 = vector.load %arg7[%c0_37, %c0_38, %c0_39] : memref<8x32x128xf32, #tpu.memory_space<vmem>>, vector<1x32x128xf32>
    %76 = vector.shape_cast %75 : vector<1x32x128xf32> to vector<32x128xf32>
    %77 = vector.shape_cast %74 : vector<32x128xf32> to vector<1x32x128xf32>
    tpu.vector_store %arg7[%c0_37, %c0_38, %c0_39], %77 {strides = array<i32>} : memref<8x32x128xf32, #tpu.memory_space<vmem>>, vector<1x32x128xf32>,
    %78 = arith.mulf %20, %73 : vector<32x128xf32>
    %c1_40 = arith.constant 1 : index
    %c0_41 = arith.constant 0 : index
    %c0_42 = arith.constant 0 : index
    %79 = vector.load %arg7[%c1_40, %c0_41, %c0_42] : memref<8x32x128xf32, #tpu.memory_space<vmem>>, vector<1x32x128xf32>
    %80 = vector.shape_cast %79 : vector<1x32x128xf32> to vector<32x128xf32>
    %81 = vector.shape_cast %78 : vector<32x128xf32> to vector<1x32x128xf32>
    tpu.vector_store %arg7[%c1_40, %c0_41, %c0_42], %81 {strides = array<i32>} : memref<8x32x128xf32, #tpu.memory_space<vmem>>, vector<1x32x128xf32>,
    %82 = arith.mulf %24, %73 : vector<32x128xf32>
    %c2_43 = arith.constant 2 : index
    %c0_44 = arith.constant 0 : index
    %c0_45 = arith.constant 0 : index
    %83 = vector.load %arg7[%c2_43, %c0_44, %c0_45] : memref<8x32x128xf32, #tpu.memory_space<vmem>>, vector<1x32x128xf32>
    %84 = vector.shape_cast %83 : vector<1x32x128xf32> to vector<32x128xf32>
    %85 = vector.shape_cast %82 : vector<32x128xf32> to vector<1x32x128xf32>
    tpu.vector_store %arg7[%c2_43, %c0_44, %c0_45], %85 {strides = array<i32>} : memref<8x32x128xf32, #tpu.memory_space<vmem>>, vector<1x32x128xf32>,
    %86 = arith.mulf %27, %73 : vector<32x128xf32>
    %c3_46 = arith.constant 3 : index
    %c0_47 = arith.constant 0 : index
    %c0_48 = arith.constant 0 : index
    %87 = vector.load %arg7[%c3_46, %c0_47, %c0_48] : memref<8x32x128xf32, #tpu.memory_space<vmem>>, vector<1x32x128xf32>
    %88 = vector.shape_cast %87 : vector<1x32x128xf32> to vector<32x128xf32>
    %89 = vector.shape_cast %86 : vector<32x128xf32> to vector<1x32x128xf32>
    tpu.vector_store %arg7[%c3_46, %c0_47, %c0_48], %89 {strides = array<i32>} : memref<8x32x128xf32, #tpu.memory_space<vmem>>, vector<1x32x128xf32>,
    %90 = arith.mulf %30, %73 : vector<32x128xf32>
    %c4_49 = arith.constant 4 : index
    %c0_50 = arith.constant 0 : index
    %c0_51 = arith.constant 0 : index
    %91 = vector.load %arg7[%c4_49, %c0_50, %c0_51] : memref<8x32x128xf32, #tpu.memory_space<vmem>>, vector<1x32x128xf32>
    %92 = vector.shape_cast %91 : vector<1x32x128xf32> to vector<32x128xf32>
    %93 = vector.shape_cast %90 : vector<32x128xf32> to vector<1x32x128xf32>
    tpu.vector_store %arg7[%c4_49, %c0_50, %c0_51], %93 {strides = array<i32>} : memref<8x32x128xf32, #tpu.memory_space<vmem>>, vector<1x32x128xf32>,
    %94 = arith.mulf %34, %73 : vector<32x128xf32>
    %c5_52 = arith.constant 5 : index
    %c0_53 = arith.constant 0 : index
    %c0_54 = arith.constant 0 : index
    %95 = vector.load %arg7[%c5_52, %c0_53, %c0_54] : memref<8x32x128xf32, #tpu.memory_space<vmem>>, vector<1x32x128xf32>
    %96 = vector.shape_cast %95 : vector<1x32x128xf32> to vector<32x128xf32>
    %97 = vector.shape_cast %94 : vector<32x128xf32> to vector<1x32x128xf32>
    tpu.vector_store %arg7[%c5_52, %c0_53, %c0_54], %97 {strides = array<i32>} : memref<8x32x128xf32, #tpu.memory_space<vmem>>, vector<1x32x128xf32>,
    %98 = arith.mulf %37, %73 : vector<32x128xf32>
    %c6_55 = arith.constant 6 : index
    %c0_56 = arith.constant 0 : index
    %c0_57 = arith.constant 0 : index
    %99 = vector.load %arg7[%c6_55, %c0_56, %c0_57] : memref<8x32x128xf32, #tpu.memory_space<vmem>>, vector<1x32x128xf32>
    %100 = vector.shape_cast %99 : vector<1x32x128xf32> to vector<32x128xf32>
    %101 = vector.shape_cast %98 : vector<32x128xf32> to vector<1x32x128xf32>
    tpu.vector_store %arg7[%c6_55, %c0_56, %c0_57], %101 {strides = array<i32>} : memref<8x32x128xf32, #tpu.memory_space<vmem>>, vector<1x32x128xf32>,
    %102 = arith.mulf %41, %73 : vector<32x128xf32>
    %c7_58 = arith.constant 7 : index
    %c0_59 = arith.constant 0 : index
    %c0_60 = arith.constant 0 : index
    %103 = vector.load %arg7[%c7_58, %c0_59, %c0_60] : memref<8x32x128xf32, #tpu.memory_space<vmem>>, vector<1x32x128xf32>
    %104 = vector.shape_cast %103 : vector<1x32x128xf32> to vector<32x128xf32>
    %105 = vector.shape_cast %102 : vector<32x128xf32> to vector<1x32x128xf32>
    tpu.vector_store %arg7[%c7_58, %c0_59, %c0_60], %105 {strides = array<i32>} : memref<8x32x128xf32, #tpu.memory_space<vmem>>, vector<1x32x128xf32>,
    %c1_i32_61 = arith.constant 1 : i32
    %c0_i32_62 = arith.constant 0 : i32
    %c0_i32_63 = arith.constant 0 : i32
    %106 = tpu.memref_slice %arg3[%arg0, %c0_i32_62, %1, %c0_i32_63] : memref<2x1x32x128xf32, #tpu.memory_space<any>> -> memref<1x1x32x128xf32, #tpu.memory_space<any>>
    %107 = tpu.memref_squeeze %106 : memref<1x1x32x128xf32, #tpu.memory_space<any>> -> memref<1x32x128xf32, #tpu.memory_space<any>>
    %108 = tpu.memref_slice %arg8[%c1_i32_61] : memref<2x!tpu.dma_semaphore, #tpu.memory_space<semaphore_mem>> -> memref<1x!tpu.dma_semaphore, #tpu.memory_space<semaphore_mem>>
    %109 = tpu.memref_squeeze %108 : memref<1x!tpu.dma_semaphore, #tpu.memory_space<semaphore_mem>> -> memref<!tpu.dma_semaphore, #tpu.memory_space<semaphore_mem>>
    tpu.wait_dma2 semaphore(%109 : memref<!tpu.dma_semaphore, #tpu.memory_space<semaphore_mem>>) src(%107 : memref<1x32x128xf32, #tpu.memory_space<any>>) dst(%arg6 : memref<1x32x128xf32, #tpu.memory_space<vmem>>)
    %c0_64 = arith.constant 0 : index
    %c0_65 = arith.constant 0 : index
    %c0_66 = arith.constant 0 : index
    %110 = vector.load %arg6[%c0_64, %c0_65, %c0_66] : memref<1x32x128xf32, #tpu.memory_space<vmem>>, vector<1x32x128xf32>
    %111 = vector.shape_cast %110 : vector<1x32x128xf32> to vector<32x128xf32>
    %112 = arith.mulf %63, %73 : vector<32x128xf32>
    %cst_67 = arith.constant 1.000000e+00 : f32
    %113 = vector.broadcast %cst_67 : f32 to vector<32x128xf32>
    %114 = arith.subf %113, %112 : vector<32x128xf32>
    %115 = arith.mulf %114, %111 : vector<32x128xf32>
    %c31_i32_68 = arith.constant 31 : i32
    %116 = tpu.dynamic_rotate %111 by %c31_i32_68 dim 0 : vector<32x128xf32>, i32 -> vector<32x128xf32>
    %c1_i32_69 = arith.constant 1 : i32
    %117 = tpu.dynamic_rotate %111 by %c1_i32_69 dim 0 : vector<32x128xf32>, i32 -> vector<32x128xf32>
    %c0_70 = arith.constant 0 : index
    %c0_71 = arith.constant 0 : index
    %c0_72 = arith.constant 0 : index
    %118 = vector.load %arg7[%c0_70, %c0_71, %c0_72] : memref<8x32x128xf32, #tpu.memory_space<vmem>>, vector<1x32x128xf32>
    %119 = vector.shape_cast %118 : vector<1x32x128xf32> to vector<32x128xf32>
    %c127_i32_73 = arith.constant 127 : i32
    %120 = tpu.dynamic_rotate %116 by %c127_i32_73 dim 1 : vector<32x128xf32>, i32 -> vector<32x128xf32>
    %121 = arith.mulf %119, %120 : vector<32x128xf32>
    %c1_74 = arith.constant 1 : index
    %c0_75 = arith.constant 0 : index
    %c0_76 = arith.constant 0 : index
    %122 = vector.load %arg7[%c1_74, %c0_75, %c0_76] : memref<8x32x128xf32, #tpu.memory_space<vmem>>, vector<1x32x128xf32>
    %123 = vector.shape_cast %122 : vector<1x32x128xf32> to vector<32x128xf32>
    %124 = arith.mulf %123, %116 : vector<32x128xf32>
    %125 = arith.addf %121, %124 : vector<32x128xf32>
    %c2_77 = arith.constant 2 : index
    %c0_78 = arith.constant 0 : index
    %c0_79 = arith.constant 0 : index
    %126 = vector.load %arg7[%c2_77, %c0_78, %c0_79] : memref<8x32x128xf32, #tpu.memory_space<vmem>>, vector<1x32x128xf32>
    %127 = vector.shape_cast %126 : vector<1x32x128xf32> to vector<32x128xf32>
    %c1_i32_80 = arith.constant 1 : i32
    %128 = tpu.dynamic_rotate %116 by %c1_i32_80 dim 1 : vector<32x128xf32>, i32 -> vector<32x128xf32>
    %129 = arith.mulf %127, %128 : vector<32x128xf32>
    %c3_81 = arith.constant 3 : index
    %c0_82 = arith.constant 0 : index
    %c0_83 = arith.constant 0 : index
    %130 = vector.load %arg7[%c3_81, %c0_82, %c0_83] : memref<8x32x128xf32, #tpu.memory_space<vmem>>, vector<1x32x128xf32>
    %131 = vector.shape_cast %130 : vector<1x32x128xf32> to vector<32x128xf32>
    %c127_i32_84 = arith.constant 127 : i32
    %132 = tpu.dynamic_rotate %111 by %c127_i32_84 dim 1 : vector<32x128xf32>, i32 -> vector<32x128xf32>
    %133 = arith.mulf %131, %132 : vector<32x128xf32>
    %134 = arith.addf %129, %133 : vector<32x128xf32>
    %135 = arith.addf %125, %134 : vector<32x128xf32>
    %c4_85 = arith.constant 4 : index
    %c0_86 = arith.constant 0 : index
    %c0_87 = arith.constant 0 : index
    %136 = vector.load %arg7[%c4_85, %c0_86, %c0_87] : memref<8x32x128xf32, #tpu.memory_space<vmem>>, vector<1x32x128xf32>
    %137 = vector.shape_cast %136 : vector<1x32x128xf32> to vector<32x128xf32>
    %c1_i32_88 = arith.constant 1 : i32
    %138 = tpu.dynamic_rotate %111 by %c1_i32_88 dim 1 : vector<32x128xf32>, i32 -> vector<32x128xf32>
    %139 = arith.mulf %137, %138 : vector<32x128xf32>
    %c5_89 = arith.constant 5 : index
    %c0_90 = arith.constant 0 : index
    %c0_91 = arith.constant 0 : index
    %140 = vector.load %arg7[%c5_89, %c0_90, %c0_91] : memref<8x32x128xf32, #tpu.memory_space<vmem>>, vector<1x32x128xf32>
    %141 = vector.shape_cast %140 : vector<1x32x128xf32> to vector<32x128xf32>
    %c127_i32_92 = arith.constant 127 : i32
    %142 = tpu.dynamic_rotate %117 by %c127_i32_92 dim 1 : vector<32x128xf32>, i32 -> vector<32x128xf32>
    %143 = arith.mulf %141, %142 : vector<32x128xf32>
    %144 = arith.addf %139, %143 : vector<32x128xf32>
    %c6_93 = arith.constant 6 : index
    %c0_94 = arith.constant 0 : index
    %c0_95 = arith.constant 0 : index
    %145 = vector.load %arg7[%c6_93, %c0_94, %c0_95] : memref<8x32x128xf32, #tpu.memory_space<vmem>>, vector<1x32x128xf32>
    %146 = vector.shape_cast %145 : vector<1x32x128xf32> to vector<32x128xf32>
    %147 = arith.mulf %146, %117 : vector<32x128xf32>
    %c7_96 = arith.constant 7 : index
    %c0_97 = arith.constant 0 : index
    %c0_98 = arith.constant 0 : index
    %148 = vector.load %arg7[%c7_96, %c0_97, %c0_98] : memref<8x32x128xf32, #tpu.memory_space<vmem>>, vector<1x32x128xf32>
    %149 = vector.shape_cast %148 : vector<1x32x128xf32> to vector<32x128xf32>
    %c1_i32_99 = arith.constant 1 : i32
    %150 = tpu.dynamic_rotate %117 by %c1_i32_99 dim 1 : vector<32x128xf32>, i32 -> vector<32x128xf32>
    %151 = arith.mulf %149, %150 : vector<32x128xf32>
    %152 = arith.addf %147, %151 : vector<32x128xf32>
    %153 = arith.addf %144, %152 : vector<32x128xf32>
    %154 = arith.addf %135, %153 : vector<32x128xf32>
    %155 = arith.addf %115, %154 : vector<32x128xf32>
    %c31_i32_100 = arith.constant 31 : i32
    %156 = tpu.dynamic_rotate %155 by %c31_i32_100 dim 0 : vector<32x128xf32>, i32 -> vector<32x128xf32>
    %c1_i32_101 = arith.constant 1 : i32
    %157 = tpu.dynamic_rotate %155 by %c1_i32_101 dim 0 : vector<32x128xf32>, i32 -> vector<32x128xf32>
    %c0_102 = arith.constant 0 : index
    %c0_103 = arith.constant 0 : index
    %c0_104 = arith.constant 0 : index
    %158 = vector.load %arg7[%c0_102, %c0_103, %c0_104] : memref<8x32x128xf32, #tpu.memory_space<vmem>>, vector<1x32x128xf32>
    %159 = vector.shape_cast %158 : vector<1x32x128xf32> to vector<32x128xf32>
    %c127_i32_105 = arith.constant 127 : i32
    %160 = tpu.dynamic_rotate %156 by %c127_i32_105 dim 1 : vector<32x128xf32>, i32 -> vector<32x128xf32>
    %161 = arith.mulf %159, %160 : vector<32x128xf32>
    %c1_106 = arith.constant 1 : index
    %c0_107 = arith.constant 0 : index
    %c0_108 = arith.constant 0 : index
    %162 = vector.load %arg7[%c1_106, %c0_107, %c0_108] : memref<8x32x128xf32, #tpu.memory_space<vmem>>, vector<1x32x128xf32>
    %163 = vector.shape_cast %162 : vector<1x32x128xf32> to vector<32x128xf32>
    %164 = arith.mulf %163, %156 : vector<32x128xf32>
    %165 = arith.addf %161, %164 : vector<32x128xf32>
    %c2_109 = arith.constant 2 : index
    %c0_110 = arith.constant 0 : index
    %c0_111 = arith.constant 0 : index
    %166 = vector.load %arg7[%c2_109, %c0_110, %c0_111] : memref<8x32x128xf32, #tpu.memory_space<vmem>>, vector<1x32x128xf32>
    %167 = vector.shape_cast %166 : vector<1x32x128xf32> to vector<32x128xf32>
    %c1_i32_112 = arith.constant 1 : i32
    %168 = tpu.dynamic_rotate %156 by %c1_i32_112 dim 1 : vector<32x128xf32>, i32 -> vector<32x128xf32>
    %169 = arith.mulf %167, %168 : vector<32x128xf32>
    %c3_113 = arith.constant 3 : index
    %c0_114 = arith.constant 0 : index
    %c0_115 = arith.constant 0 : index
    %170 = vector.load %arg7[%c3_113, %c0_114, %c0_115] : memref<8x32x128xf32, #tpu.memory_space<vmem>>, vector<1x32x128xf32>
    %171 = vector.shape_cast %170 : vector<1x32x128xf32> to vector<32x128xf32>
    %c127_i32_116 = arith.constant 127 : i32
    %172 = tpu.dynamic_rotate %155 by %c127_i32_116 dim 1 : vector<32x128xf32>, i32 -> vector<32x128xf32>
    %173 = arith.mulf %171, %172 : vector<32x128xf32>
    %174 = arith.addf %169, %173 : vector<32x128xf32>
    %175 = arith.addf %165, %174 : vector<32x128xf32>
    %c4_117 = arith.constant 4 : index
    %c0_118 = arith.constant 0 : index
    %c0_119 = arith.constant 0 : index
    %176 = vector.load %arg7[%c4_117, %c0_118, %c0_119] : memref<8x32x128xf32, #tpu.memory_space<vmem>>, vector<1x32x128xf32>
    %177 = vector.shape_cast %176 : vector<1x32x128xf32> to vector<32x128xf32>
    %c1_i32_120 = arith.constant 1 : i32
    %178 = tpu.dynamic_rotate %155 by %c1_i32_120 dim 1 : vector<32x128xf32>, i32 -> vector<32x128xf32>
    %179 = arith.mulf %177, %178 : vector<32x128xf32>
    %c5_121 = arith.constant 5 : index
    %c0_122 = arith.constant 0 : index
    %c0_123 = arith.constant 0 : index
    %180 = vector.load %arg7[%c5_121, %c0_122, %c0_123] : memref<8x32x128xf32, #tpu.memory_space<vmem>>, vector<1x32x128xf32>
    %181 = vector.shape_cast %180 : vector<1x32x128xf32> to vector<32x128xf32>
    %c127_i32_124 = arith.constant 127 : i32
    %182 = tpu.dynamic_rotate %157 by %c127_i32_124 dim 1 : vector<32x128xf32>, i32 -> vector<32x128xf32>
    %183 = arith.mulf %181, %182 : vector<32x128xf32>
    %184 = arith.addf %179, %183 : vector<32x128xf32>
    %c6_125 = arith.constant 6 : index
    %c0_126 = arith.constant 0 : index
    %c0_127 = arith.constant 0 : index
    %185 = vector.load %arg7[%c6_125, %c0_126, %c0_127] : memref<8x32x128xf32, #tpu.memory_space<vmem>>, vector<1x32x128xf32>
    %186 = vector.shape_cast %185 : vector<1x32x128xf32> to vector<32x128xf32>
    %187 = arith.mulf %186, %157 : vector<32x128xf32>
    %c7_128 = arith.constant 7 : index
    %c0_129 = arith.constant 0 : index
    %c0_130 = arith.constant 0 : index
    %188 = vector.load %arg7[%c7_128, %c0_129, %c0_130] : memref<8x32x128xf32, #tpu.memory_space<vmem>>, vector<1x32x128xf32>
    %189 = vector.shape_cast %188 : vector<1x32x128xf32> to vector<32x128xf32>
    %c1_i32_131 = arith.constant 1 : i32
    %190 = tpu.dynamic_rotate %157 by %c1_i32_131 dim 1 : vector<32x128xf32>, i32 -> vector<32x128xf32>
    %191 = arith.mulf %189, %190 : vector<32x128xf32>
    %192 = arith.addf %187, %191 : vector<32x128xf32>
    %193 = arith.addf %184, %192 : vector<32x128xf32>
    %194 = arith.addf %175, %193 : vector<32x128xf32>
    %195 = arith.addf %115, %194 : vector<32x128xf32>
    %c31_i32_132 = arith.constant 31 : i32
    %196 = tpu.dynamic_rotate %195 by %c31_i32_132 dim 0 : vector<32x128xf32>, i32 -> vector<32x128xf32>
    %c1_i32_133 = arith.constant 1 : i32
    %197 = tpu.dynamic_rotate %195 by %c1_i32_133 dim 0 : vector<32x128xf32>, i32 -> vector<32x128xf32>
    %c0_134 = arith.constant 0 : index
    %c0_135 = arith.constant 0 : index
    %c0_136 = arith.constant 0 : index
    %198 = vector.load %arg7[%c0_134, %c0_135, %c0_136] : memref<8x32x128xf32, #tpu.memory_space<vmem>>, vector<1x32x128xf32>
    %199 = vector.shape_cast %198 : vector<1x32x128xf32> to vector<32x128xf32>
    %c127_i32_137 = arith.constant 127 : i32
    %200 = tpu.dynamic_rotate %196 by %c127_i32_137 dim 1 : vector<32x128xf32>, i32 -> vector<32x128xf32>
    %201 = arith.mulf %199, %200 : vector<32x128xf32>
    %c1_138 = arith.constant 1 : index
    %c0_139 = arith.constant 0 : index
    %c0_140 = arith.constant 0 : index
    %202 = vector.load %arg7[%c1_138, %c0_139, %c0_140] : memref<8x32x128xf32, #tpu.memory_space<vmem>>, vector<1x32x128xf32>
    %203 = vector.shape_cast %202 : vector<1x32x128xf32> to vector<32x128xf32>
    %204 = arith.mulf %203, %196 : vector<32x128xf32>
    %205 = arith.addf %201, %204 : vector<32x128xf32>
    %c2_141 = arith.constant 2 : index
    %c0_142 = arith.constant 0 : index
    %c0_143 = arith.constant 0 : index
    %206 = vector.load %arg7[%c2_141, %c0_142, %c0_143] : memref<8x32x128xf32, #tpu.memory_space<vmem>>, vector<1x32x128xf32>
    %207 = vector.shape_cast %206 : vector<1x32x128xf32> to vector<32x128xf32>
    %c1_i32_144 = arith.constant 1 : i32
    %208 = tpu.dynamic_rotate %196 by %c1_i32_144 dim 1 : vector<32x128xf32>, i32 -> vector<32x128xf32>
    %209 = arith.mulf %207, %208 : vector<32x128xf32>
    %c3_145 = arith.constant 3 : index
    %c0_146 = arith.constant 0 : index
    %c0_147 = arith.constant 0 : index
    %210 = vector.load %arg7[%c3_145, %c0_146, %c0_147] : memref<8x32x128xf32, #tpu.memory_space<vmem>>, vector<1x32x128xf32>
    %211 = vector.shape_cast %210 : vector<1x32x128xf32> to vector<32x128xf32>
    %c127_i32_148 = arith.constant 127 : i32
    %212 = tpu.dynamic_rotate %195 by %c127_i32_148 dim 1 : vector<32x128xf32>, i32 -> vector<32x128xf32>
    %213 = arith.mulf %211, %212 : vector<32x128xf32>
    %214 = arith.addf %209, %213 : vector<32x128xf32>
    %215 = arith.addf %205, %214 : vector<32x128xf32>
    %c4_149 = arith.constant 4 : index
    %c0_150 = arith.constant 0 : index
    %c0_151 = arith.constant 0 : index
    %216 = vector.load %arg7[%c4_149, %c0_150, %c0_151] : memref<8x32x128xf32, #tpu.memory_space<vmem>>, vector<1x32x128xf32>
    %217 = vector.shape_cast %216 : vector<1x32x128xf32> to vector<32x128xf32>
    %c1_i32_152 = arith.constant 1 : i32
    %218 = tpu.dynamic_rotate %195 by %c1_i32_152 dim 1 : vector<32x128xf32>, i32 -> vector<32x128xf32>
    %219 = arith.mulf %217, %218 : vector<32x128xf32>
    %c5_153 = arith.constant 5 : index
    %c0_154 = arith.constant 0 : index
    %c0_155 = arith.constant 0 : index
    %220 = vector.load %arg7[%c5_153, %c0_154, %c0_155] : memref<8x32x128xf32, #tpu.memory_space<vmem>>, vector<1x32x128xf32>
    %221 = vector.shape_cast %220 : vector<1x32x128xf32> to vector<32x128xf32>
    %c127_i32_156 = arith.constant 127 : i32
    %222 = tpu.dynamic_rotate %197 by %c127_i32_156 dim 1 : vector<32x128xf32>, i32 -> vector<32x128xf32>
    %223 = arith.mulf %221, %222 : vector<32x128xf32>
    %224 = arith.addf %219, %223 : vector<32x128xf32>
    %c6_157 = arith.constant 6 : index
    %c0_158 = arith.constant 0 : index
    %c0_159 = arith.constant 0 : index
    %225 = vector.load %arg7[%c6_157, %c0_158, %c0_159] : memref<8x32x128xf32, #tpu.memory_space<vmem>>, vector<1x32x128xf32>
    %226 = vector.shape_cast %225 : vector<1x32x128xf32> to vector<32x128xf32>
    %227 = arith.mulf %226, %197 : vector<32x128xf32>
    %c7_160 = arith.constant 7 : index
    %c0_161 = arith.constant 0 : index
    %c0_162 = arith.constant 0 : index
    %228 = vector.load %arg7[%c7_160, %c0_161, %c0_162] : memref<8x32x128xf32, #tpu.memory_space<vmem>>, vector<1x32x128xf32>
    %229 = vector.shape_cast %228 : vector<1x32x128xf32> to vector<32x128xf32>
    %c1_i32_163 = arith.constant 1 : i32
    %230 = tpu.dynamic_rotate %197 by %c1_i32_163 dim 1 : vector<32x128xf32>, i32 -> vector<32x128xf32>
    %231 = arith.mulf %229, %230 : vector<32x128xf32>
    %232 = arith.addf %227, %231 : vector<32x128xf32>
    %233 = arith.addf %224, %232 : vector<32x128xf32>
    %234 = arith.addf %215, %233 : vector<32x128xf32>
    %235 = arith.addf %115, %234 : vector<32x128xf32>
    %236 = vector.extract_strided_slice %235 {offsets = [8, 0], sizes = [16, 128], strides = [1, 1]} : vector<32x128xf32> to vector<16x128xf32>
    %c0_164 = arith.constant 0 : index
    %c0_165 = arith.constant 0 : index
    %c0_166 = arith.constant 0 : index
    %c0_167 = arith.constant 0 : index
    %237 = vector.load %arg4[%c0_164, %c0_165, %c0_166, %c0_167] : memref<1x1x16x128xf32, #tpu.memory_space<vmem>>, vector<1x1x16x128xf32>
    %238 = vector.shape_cast %237 : vector<1x1x16x128xf32> to vector<16x128xf32>
    %239 = vector.shape_cast %236 : vector<16x128xf32> to vector<1x1x16x128xf32>
    tpu.vector_store %arg4[%c0_164, %c0_165, %c0_166, %c0_167], %239 {strides = array<i32>} : memref<1x1x16x128xf32, #tpu.memory_space<vmem>>, vector<1x1x16x128xf32>,
    return
  }
  func.func @transform_2(%arg0: i32, %arg1: i32) -> (i32, i32, i32, i32) {
    %c0_i32 = arith.constant 0 : i32
    %c0_i32_0 = arith.constant 0 : i32
    %c0_i32_1 = arith.constant 0 : i32
    return %arg0, %c0_i32, %arg1, %c0_i32_0 : i32, i32, i32, i32
  }
}

</mosaic_0001>

<llo_original>
// kernel: tpu_custom_call.1
$region0: #{tpu_custom_call.1}
  #allocation0 [shape = 'u32[]', space=smem, size = 0x4, offset = 0x4, fixed_abs, tag = 'smem constant byte address 0x4 - core index']
  #allocation1 [shape = 'u32[144,128]{1,0:T(1,128)}', space=vmem, size = 0x12000, scoped, tag = 'internal scratch']
  #allocation2 [shape = 'f32[8,32,128]{2,1,0:T(8,128)}', space=vmem, size = 0x20000, scoped, tag = 'scratch operand']
  #allocation3 [shape = 'f32[1,32,128]{2,1,0:T(8,128)}', space=vmem, size = 0x4000, scoped, tag = 'scratch operand']
  #allocation4 [shape = 'f32[8,32,128]{2,1,0:T(8,128)}', space=vmem, size = 0x20000, scoped, tag = 'scratch operand']
  #allocation5 [shape = 's32[2]{0}', space=sflag, size = 0x8, scoped, tag = 'scratch operand']
  #allocation8 [shape = 's32[]', space=sflag, size = 0x4, offset = 0, fixed_abs, tag = 'sflag constant byte address 0x0 - dummy sync flag']
  #allocation9 [shape = 's32[]', space=sflag, size = 0x4, offset = 0, fixed_abs, tag = 'sflag constant byte address 0x0 - dummy sync flag']
  #allocation10 [shape = 'u32[]', space=smem, size = 0x4, offset = 0x44, fixed_abs, tag = 'smem constant byte address 0x44 - assertion arg 0']
  #allocation11 [shape = 'u32[]', space=smem, size = 0x4, offset = 0x48, fixed_abs, tag = 'smem constant byte address 0x48 - assertion arg 1']
  #allocation12 [shape = 's32[]', space=sflag, size = 0x4, offset = 0, fixed_abs, tag = 'sflag constant byte address 0x0 - dummy sync flag']
  #allocation13 [shape = 's32[]', space=sflag, size = 0x4, offset = 0, fixed_abs, tag = 'sflag constant byte address 0x0 - dummy sync flag']
  %s0 = inlined_call_operand.hbm [shape: f32[2,8,32,128], index: 0, kind: input, shape index: {}]
  %s1 = inlined_call_operand.hbm [shape: f32[2,1,32,128], index: 1, kind: input, shape index: {}]
  %s2 = inlined_call_operand.hbm [shape: f32[2,1,16,128], index: 2, kind: output, shape index: {}]
  %s3 = sld [smem:[#allocation0]]
  $region33: #{tpu_custom_call.1} parent=0
    _
  %s5 = ssub.s32 1, %s3
  %s6 = scalar_select 0, %s5, %s3
  $region1: #{tpu_custom_call.1} parent=0
    #allocation6 [shape = 'u8[16384]{0}', space=vmem, size = 0x4000, scoped, tag = 'output window, operand 0']
    #allocation7 [shape = 's32[2]{0}', space=sflag, size = 0x8, scoped, tag = 'scoped memory for tpu_custom_call.1']
    %7 = vsyncpa [#allocation7], 0
    %s8 = scalar_lea.sflag [#allocation7], 1
    %9 = vsyncpa %s8, 0
    loop: start=0, step=1, limit=3
    $region2: #{tpu_custom_call.1} parent=1 // loop_pre_header
      _
    $region3: #{tpu_custom_call.1} parent=1 // loop_header
      %s11 = sphi 0, %s15
      %p12 = scmp.ge.s32.totalorder %s11, 3
      %s17 = sphi 0, %s27
      %s18 = sphi 0, %s23
      %s19 = sphi 0, %s17
      %s20 = sphi 0, %s18
      %s32 = sphi 0, %s34
      %s35 = sphi 0, %s32
      %s45 = sphi 0, %s35
    $region4: #{tpu_custom_call.1} parent=1 // loop_header_branch
      %14 = sbr.rel (%p12) target = $region8
    $region5: #{tpu_custom_call.1} parent=1 // loop_body
      %s16 = ssub.s32 %s11, 1
      %s21 = sadd.s32 1, %s18
      %p22 = scmp.ge.s32.totalorder %s21, 1
      %s23 = scalar_select %p22, 0, %s21
      %s24 = sadd.s32 1, %s17
      %s25 = scalar_select %p22, %s24, %s17
      %p26 = scmp.ge.s32.totalorder %s25, 2
      %s27 = scalar_select %p26, 0, %s25
      %s28 = ssub.s32 %s17, %s27
      %s29 = ssub.s32 %s18, %s23
      %s30 = sor.u32 %s28, %s29
      %p31 = scmp.eq.s32.totalorder %s30, 0
      %s33 = sadd.s32 %s32, 1
      %s34 = scalar_select %p31, %s32, %s33
      %p36 = pneg %p31
      %p37 = scmp.eq.s32.totalorder %s11, 1
      %p38 = por %p36, %p37
      %p39 = scmp.ne.s32.totalorder %s32, %s35
      %p40 = scmp.eq.s32.totalorder %s11, 0
      %p41 = por %p39, %p40
      %p42 = scmp.ne.s32.totalorder %s32, %s35
      %p43 = scmp.eq.s32.totalorder %s16, 1
      %p44 = por %p42, %p43
      %p46 = scmp.ne.s32.totalorder %s35, %s45
      %p47 = scmp.eq.s32.totalorder %s16, 0
      %p48 = por %p46, %p47
      %p49 = scmp.lt.s32.totalorder %s11, 2
      // Predicated region
      $region9: #{tpu_custom_call.1} parent=5 // pred_check
        %p50 = pneg %p49
      $region10: #{tpu_custom_call.1} parent=5 // pred_check_branch
        %52 = sbr.rel (%p50) target = $region12
      $region11: #{tpu_custom_call.1} parent=5 // pred_region
        %p53 = pneg %p41
        %p54 = pneg %p38
        %s55 = sand.u32 %s32, 1
        %s56 = scalar_lea.sflag [#allocation7], %s55
        %s57 = sand.u32 %s32, 1
        %s58 = smul.addr %s57, 16
        %s59 = scalar_lea.vmem [#allocation6], %s58
        %s60 = smul.u32 2, %s18
        %s61 = smul.u32 %s18, 16
        %s62 = smul.u32 %s17, 256
        %s63 = sadd.s32 %s61, %s62
        %s64 = smul.addr %s63, 16
        %s65 = scalar_lea.hbm %s0, %s64
        // Predicated region
        $region13: #{tpu_custom_call.1} parent=11 // pred_check
          _
        $region14: #{tpu_custom_call.1} parent=11 // pred_check_branch
          %67 = sbr.rel target = $region16
        $region15: #{tpu_custom_call.1} parent=11 // pred_region
          %68 = sst [smem:[#allocation10]] [#allocation9]
          %69 = sst [smem:[#allocation11]] [#allocation8]
        $region16: #{tpu_custom_call.1} parent=11 // pred_fallthru
          _
        %71 = shalt.err (0)
        %s73 = sshll.u32 [#allocation2], 4
        %s74 = int_to_ptr.vmem [resolvable:$true] %s73
        %76 = dma.hbm_to_vmem [thread:$0]  %s65, 4096, %s74, [#allocation5]
        %s77 = smul.u32 %s17, 32
        %s78 = sadd.s32 %s61, %s77
        %s79 = smul.addr %s78, 16
        %s80 = scalar_lea.hbm %s1, %s79
        %s81 = scalar_lea.sflag [#allocation5], 1
        // Predicated region
        $region17: #{tpu_custom_call.1} parent=11 // pred_check
          _
        $region18: #{tpu_custom_call.1} parent=11 // pred_check_branch
          %83 = sbr.rel target = $region20
        $region19: #{tpu_custom_call.1} parent=11 // pred_region
          %84 = sst [smem:[#allocation10]] [#allocation13]
          %85 = sst [smem:[#allocation11]] [#allocation12]
        $region20: #{tpu_custom_call.1} parent=11 // pred_fallthru
          _
        %87 = shalt.err (0)
        %s89 = sshll.u32 [#allocation3], 4
        %s90 = int_to_ptr.vmem [resolvable:$true] %s89
        %92 = dma.hbm_to_vmem [thread:$0]  %s80, 512, %s90, %s81
        %s93 = smul.u32 8, 32
        %s94 = smul.u32 %s93, 1
        %s95 = sshll.u32 %s94, 4
        %96 = dma.done [#allocation5], %s95
        %v97 = vld [vmem:[#allocation2] sm:$0xff]
        %v98 = vld [vmem:[#allocation2 + $0x8] sm:$0xff]
        %v99 = vld [vmem:[#allocation2 + $0x10] sm:$0xff]
        %v100 = vld [vmem:[#allocation2 + $0x18] sm:$0xff]
        %v101 = vrot.slane %v97, 1
        %v102 = vrot.slane %v98, 1
        %v103 = vrot.slane %v99, 1
        %v104 = vrot.slane %v100, 1
        %v105 = vlaneseq
        %v106 = vshrl.u32 %v105, 7
        %vm107 = vcmp.lt.s32.totalorder %v106, 7
        %v108 = vsel %vm107, %v103, %v104
        %v109 = vsel %vm107, %v102, %v103
        %v110 = vsel %vm107, %v101, %v102
        %v111 = vsel %vm107, %v104, %v101
        %112 = vrot.lane.b32.xlu0 %v110, 127
        %v113 = vpop.permute.xlu0 %112
        %114 = vrot.lane.b32.xlu0 %v109, 127
        %v115 = vpop.permute.xlu0 %114
        %116 = vrot.lane.b32.xlu0 %v108, 127
        %v117 = vpop.permute.xlu0 %116
        %118 = vrot.lane.b32.xlu0 %v111, 127
        %v119 = vpop.permute.xlu0 %118
        %s120 = scalar_lea.vmem [#allocation2], 32
        %v121 = vld [vmem:[%s120] sm:$0xff]
        %v122 = vld [vmem:[%s120 + $0x8] sm:$0xff]
        %v123 = vld [vmem:[%s120 + $0x10] sm:$0xff]
        %v124 = vld [vmem:[%s120 + $0x18] sm:$0xff]
        %v125 = vrot.slane %v121, 1
        %v126 = vrot.slane %v122, 1
        %v127 = vrot.slane %v123, 1
        %v128 = vrot.slane %v124, 1
        %v129 = vsel %vm107, %v127, %v128
        %v130 = vsel %vm107, %v126, %v127
        %v131 = vsel %vm107, %v125, %v126
        %v132 = vsel %vm107, %v128, %v125
        %s133 = scalar_lea.vmem [#allocation2], 64
        %v134 = vld [vmem:[%s133] sm:$0xff]
        %v135 = vld [vmem:[%s133 + $0x8] sm:$0xff]
        %v136 = vld [vmem:[%s133 + $0x10] sm:$0xff]
        %v137 = vld [vmem:[%s133 + $0x18] sm:$0xff]
        %v138 = vrot.slane %v134, 1
        %v139 = vrot.slane %v135, 1
        %v140 = vrot.slane %v136, 1
        %v141 = vrot.slane %v137, 1
        %v142 = vsel %vm107, %v140, %v141
        %v143 = vsel %vm107, %v139, %v140
        %v144 = vsel %vm107, %v138, %v139
        %v145 = vsel %vm107, %v141, %v138
        %146 = vrot.lane.b32.xlu0 %v144, 1
        %v147 = vpop.permute.xlu0 %146
        %148 = vrot.lane.b32.xlu0 %v143, 1
        %v149 = vpop.permute.xlu0 %148
        %150 = vrot.lane.b32.xlu0 %v142, 1
        %v151 = vpop.permute.xlu0 %150
        %152 = vrot.lane.b32.xlu0 %v145, 1
        %v153 = vpop.permute.xlu0 %152
        %s154 = scalar_lea.vmem [#allocation2], 96
        %v155 = vld [vmem:[%s154] sm:$0xff]
        %v156 = vld [vmem:[%s154 + $0x8] sm:$0xff]
        %v157 = vld [vmem:[%s154 + $0x10] sm:$0xff]
        %v158 = vld [vmem:[%s154 + $0x18] sm:$0xff]
        %159 = vrot.lane.b32.xlu0 %v155, 127
        %v160 = vpop.permute.xlu0 %159
        %161 = vrot.lane.b32.xlu0 %v156, 127
        %v162 = vpop.permute.xlu0 %161
        %163 = vrot.lane.b32.xlu0 %v157, 127
        %v164 = vpop.permute.xlu0 %163
        %165 = vrot.lane.b32.xlu0 %v158, 127
        %v166 = vpop.permute.xlu0 %165
        %s167 = scalar_lea.vmem [#allocation2], 128
        %v168 = vld [vmem:[%s167] sm:$0xff]
        %v169 = vld [vmem:[%s167 + $0x8] sm:$0xff]
        %v170 = vld [vmem:[%s167 + $0x10] sm:$0xff]
        %v171 = vld [vmem:[%s167 + $0x18] sm:$0xff]
        %172 = vrot.lane.b32.xlu0 %v168, 1
        %v173 = vpop.permute.xlu0 %172
        %174 = vrot.lane.b32.xlu0 %v169, 1
        %v175 = vpop.permute.xlu0 %174
        %176 = vrot.lane.b32.xlu0 %v170, 1
        %v177 = vpop.permute.xlu0 %176
        %178 = vrot.lane.b32.xlu0 %v171, 1
        %v179 = vpop.permute.xlu0 %178
        %s180 = scalar_lea.vmem [#allocation2], 160
        %v181 = vld [vmem:[%s180] sm:$0xff]
        %v182 = vld [vmem:[%s180 + $0x8] sm:$0xff]
        %v183 = vld [vmem:[%s180 + $0x10] sm:$0xff]
        %v184 = vld [vmem:[%s180 + $0x18] sm:$0xff]
        %v185 = vrot.slane %v181, 7
        %v186 = vrot.slane %v182, 7
        %v187 = vrot.slane %v183, 7
        %v188 = vrot.slane %v184, 7
        %vm189 = vcmp.lt.s32.totalorder %v106, 1
        %v190 = vsel %vm189, %v187, %v188
        %v191 = vsel %vm189, %v186, %v187
        %v192 = vsel %vm189, %v185, %v186
        %v193 = vsel %vm189, %v188, %v185
        %194 = vrot.lane.b32.xlu0 %v193, 127
        %v195 = vpop.permute.xlu0 %194
        %196 = vrot.lane.b32.xlu0 %v192, 127
        %v197 = vpop.permute.xlu0 %196
        %198 = vrot.lane.b32.xlu0 %v191, 127
        %v199 = vpop.permute.xlu0 %198
        %200 = vrot.lane.b32.xlu0 %v190, 127
        %v201 = vpop.permute.xlu0 %200
        %s202 = scalar_lea.vmem [#allocation2], 192
        %v203 = vld [vmem:[%s202] sm:$0xff]
        %v204 = vld [vmem:[%s202 + $0x8] sm:$0xff]
        %v205 = vld [vmem:[%s202 + $0x10] sm:$0xff]
        %v206 = vld [vmem:[%s202 + $0x18] sm:$0xff]
        %v207 = vrot.slane %v203, 7
        %v208 = vrot.slane %v204, 7
        %v209 = vrot.slane %v205, 7
        %v210 = vrot.slane %v206, 7
        %v211 = vsel %vm189, %v209, %v210
        %v212 = vsel %vm189, %v208, %v209
        %v213 = vsel %vm189, %v207, %v208
        %v214 = vsel %vm189, %v210, %v207
        %s215 = scalar_lea.vmem [#allocation2], 224
        %v216 = vld [vmem:[%s215] sm:$0xff]
        %v217 = vld [vmem:[%s215 + $0x8] sm:$0xff]
        %v218 = vld [vmem:[%s215 + $0x10] sm:$0xff]
        %v219 = vld [vmem:[%s215 + $0x18] sm:$0xff]
        %v220 = vrot.slane %v216, 7
        %v221 = vrot.slane %v217, 7
        %v222 = vrot.slane %v218, 7
        %v223 = vrot.slane %v219, 7
        %v224 = vsel %vm189, %v222, %v223
        %v225 = vsel %vm189, %v221, %v222
        %v226 = vsel %vm189, %v220, %v221
        %v227 = vsel %vm189, %v223, %v220
        %228 = vrot.lane.b32.xlu0 %v227, 1
        %v229 = vpop.permute.xlu0 %228
        %230 = vrot.lane.b32.xlu0 %v226, 1
        %v231 = vpop.permute.xlu0 %230
        %232 = vrot.lane.b32.xlu0 %v225, 1
        %v233 = vpop.permute.xlu0 %232
        %234 = vrot.lane.b32.xlu0 %v224, 1
        %v235 = vpop.permute.xlu0 %234
        %v236 = vand.u32 2147483647, %v113
        %v237 = vand.u32 2147483647, %v115
        %v238 = vand.u32 2147483647, %v117
        %v239 = vand.u32 2147483647, %v119
        %v240 = vand.u32 2147483647, %v131
        %v241 = vand.u32 2147483647, %v130
        %v242 = vand.u32 2147483647, %v129
        %v243 = vand.u32 2147483647, %v132
        %v244 = vand.u32 2147483647, %v147
        %v245 = vand.u32 2147483647, %v149
        %v246 = vand.u32 2147483647, %v151
        %v247 = vand.u32 2147483647, %v153
        %v248 = vand.u32 2147483647, %v160
        %v249 = vand.u32 2147483647, %v162
        %v250 = vand.u32 2147483647, %v164
        %v251 = vand.u32 2147483647, %v166
        %v252 = vand.u32 2147483647, %v173
        %v253 = vand.u32 2147483647, %v175
        %v254 = vand.u32 2147483647, %v177
        %v255 = vand.u32 2147483647, %v179
        %v256 = vand.u32 2147483647, %v195
        %v257 = vand.u32 2147483647, %v197
        %v258 = vand.u32 2147483647, %v199
        %v259 = vand.u32 2147483647, %v201
        %v260 = vand.u32 2147483647, %v214
        %v261 = vand.u32 2147483647, %v213
        %v262 = vand.u32 2147483647, %v212
        %v263 = vand.u32 2147483647, %v211
        %v264 = vand.u32 2147483647, %v229
        %v265 = vand.u32 2147483647, %v231
        %v266 = vand.u32 2147483647, %v233
        %v267 = vand.u32 2147483647, %v235
        %v268 = vadd.f32 %v236, %v240
        %v269 = vadd.f32 %v237, %v241
        %v270 = vadd.f32 %v238, %v242
        %v271 = vadd.f32 %v239, %v243
        %v272 = vadd.f32 %v244, %v248
        %v273 = vadd.f32 %v245, %v249
        %v274 = vadd.f32 %v246, %v250
        %v275 = vadd.f32 %v247, %v251
        %v276 = vadd.f32 %v268, %v272
        %v277 = vadd.f32 %v269, %v273
        %v278 = vadd.f32 %v270, %v274
        %v279 = vadd.f32 %v271, %v275
        %v280 = vadd.f32 %v252, %v256
        %v281 = vadd.f32 %v253, %v257
        %v282 = vadd.f32 %v254, %v258
        %v283 = vadd.f32 %v255, %v259
        %v284 = vadd.f32 %v260, %v264
        %v285 = vadd.f32 %v261, %v265
        %v286 = vadd.f32 %v262, %v266
        %v287 = vadd.f32 %v263, %v267
        %v288 = vadd.f32 %v280, %v284
        %v289 = vadd.f32 %v281, %v285
        %v290 = vadd.f32 %v282, %v286
        %v291 = vadd.f32 %v283, %v287
        %v292 = vadd.f32 %v276, %v288
        %v293 = vadd.f32 %v277, %v289
        %v294 = vadd.f32 %v278, %v290
        %v295 = vadd.f32 %v279, %v291
        %v296 = vadd.f32 %v113, %v131
        %v297 = vadd.f32 %v115, %v130
        %v298 = vadd.f32 %v117, %v129
        %v299 = vadd.f32 %v119, %v132
        %v300 = vadd.f32 %v147, %v160
        %v301 = vadd.f32 %v149, %v162
        %v302 = vadd.f32 %v151, %v164
        %v303 = vadd.f32 %v153, %v166
        %v304 = vadd.f32 %v296, %v300
        %v305 = vadd.f32 %v297, %v301
        %v306 = vadd.f32 %v298, %v302
        %v307 = vadd.f32 %v299, %v303
        %v308 = vadd.f32 %v173, %v195
        %v309 = vadd.f32 %v175, %v197
        %v310 = vadd.f32 %v177, %v199
        %v311 = vadd.f32 %v179, %v201
        %v312 = vadd.f32 %v214, %v229
        %v313 = vadd.f32 %v213, %v231
        %v314 = vadd.f32 %v212, %v233
        %v315 = vadd.f32 %v211, %v235
        %v316 = vadd.f32 %v308, %v312
        %v317 = vadd.f32 %v309, %v313
        %v318 = vadd.f32 %v310, %v314
        %v319 = vadd.f32 %v311, %v315
        %v320 = vadd.f32 %v304, %v316
        %v321 = vadd.f32 %v305, %v317
        %v322 = vadd.f32 %v306, %v318
        %v323 = vadd.f32 %v307, %v319
        %vm324 = vcmp.eq.f32.partialorder %v292, 0.0
        %vm325 = vcmp.eq.f32.partialorder %v293, 0.0
        %vm326 = vcmp.eq.f32.partialorder %v294, 0.0
        %vm327 = vcmp.eq.f32.partialorder %v295, 0.0
        %v328 = vsel %vm324, 1.0, %v292
        %v329 = vsel %vm325, 1.0, %v293
        %v330 = vsel %vm326, 1.0, %v294
        %v331 = vsel %vm327, 1.0, %v295
        %v332 = vrcp.pop %v328
        %v333 = vmul.f32 1.0, %v332
        %v334 = vrcp.pop %v329
        %v335 = vmul.f32 1.0, %v334
        %v336 = vrcp.pop %v330
        %v337 = vmul.f32 1.0, %v336
        %v338 = vrcp.pop %v331
        %v339 = vmul.f32 1.0, %v338
        %v340 = vsel %vm324, 0.0, %v333
        %v341 = vsel %vm325, 0.0, %v335
        %v342 = vsel %vm326, 0.0, %v337
        %v343 = vsel %vm327, 0.0, %v339
        %v344 = vmul.f32 %v113, %v340
        %v345 = vmul.f32 %v115, %v341
        %v346 = vmul.f32 %v117, %v342
        %v347 = vmul.f32 %v119, %v343
        %348 = vst [vmem:[#allocation4] sm:$0xff] %v344
        %349 = vst [vmem:[#allocation4 + $0x8] sm:$0xff] %v345
        %350 = vst [vmem:[#allocation4 + $0x10] sm:$0xff] %v346
        %351 = vst [vmem:[#allocation4 + $0x18] sm:$0xff] %v347
        %v352 = vmul.f32 %v131, %v340
        %v353 = vmul.f32 %v130, %v341
        %v354 = vmul.f32 %v129, %v342
        %v355 = vmul.f32 %v132, %v343
        %s356 = scalar_lea.vmem [#allocation4], 32
        %357 = vst [vmem:[%s356] sm:$0xff] %v352
        %358 = vst [vmem:[%s356 + $0x8] sm:$0xff] %v353
        %359 = vst [vmem:[%s356 + $0x10] sm:$0xff] %v354
        %360 = vst [vmem:[%s356 + $0x18] sm:$0xff] %v355
        %v361 = vmul.f32 %v147, %v340
        %v362 = vmul.f32 %v149, %v341
        %v363 = vmul.f32 %v151, %v342
        %v364 = vmul.f32 %v153, %v343
        %s365 = scalar_lea.vmem [#allocation4], 64
        %366 = vst [vmem:[%s365] sm:$0xff] %v361
        %367 = vst [vmem:[%s365 + $0x8] sm:$0xff] %v362
        %368 = vst [vmem:[%s365 + $0x10] sm:$0xff] %v363
        %369 = vst [vmem:[%s365 + $0x18] sm:$0xff] %v364
        %v370 = vmul.f32 %v160, %v340
        %v371 = vmul.f32 %v162, %v341
        %v372 = vmul.f32 %v164, %v342
        %v373 = vmul.f32 %v166, %v343
        %s374 = scalar_lea.vmem [#allocation4], 96
        %375 = vst [vmem:[%s374] sm:$0xff] %v370
        %376 = vst [vmem:[%s374 + $0x8] sm:$0xff] %v371
        %377 = vst [vmem:[%s374 + $0x10] sm:$0xff] %v372
        %378 = vst [vmem:[%s374 + $0x18] sm:$0xff] %v373
        %v379 = vmul.f32 %v173, %v340
        %v380 = vmul.f32 %v175, %v341
        %v381 = vmul.f32 %v177, %v342
        %v382 = vmul.f32 %v179, %v343
        %s383 = scalar_lea.vmem [#allocation4], 128
        %384 = vst [vmem:[%s383] sm:$0xff] %v379
        %385 = vst [vmem:[%s383 + $0x8] sm:$0xff] %v380
        %386 = vst [vmem:[%s383 + $0x10] sm:$0xff] %v381
        %387 = vst [vmem:[%s383 + $0x18] sm:$0xff] %v382
        %v388 = vmul.f32 %v195, %v340
        %v389 = vmul.f32 %v197, %v341
        %v390 = vmul.f32 %v199, %v342
        %v391 = vmul.f32 %v201, %v343
        %s392 = scalar_lea.vmem [#allocation4], 160
        %393 = vst [vmem:[%s392] sm:$0xff] %v388
        %394 = vst [vmem:[%s392 + $0x8] sm:$0xff] %v389
        %395 = vst [vmem:[%s392 + $0x10] sm:$0xff] %v390
        %396 = vst [vmem:[%s392 + $0x18] sm:$0xff] %v391
        %v397 = vmul.f32 %v214, %v340
        %v398 = vmul.f32 %v213, %v341
        %v399 = vmul.f32 %v212, %v342
        %v400 = vmul.f32 %v211, %v343
        %s401 = scalar_lea.vmem [#allocation4], 192
        %402 = vst [vmem:[%s401] sm:$0xff] %v397
        %403 = vst [vmem:[%s401 + $0x8] sm:$0xff] %v398
        %404 = vst [vmem:[%s401 + $0x10] sm:$0xff] %v399
        %405 = vst [vmem:[%s401 + $0x18] sm:$0xff] %v400
        %v406 = vmul.f32 %v229, %v340
        %v407 = vmul.f32 %v231, %v341
        %v408 = vmul.f32 %v233, %v342
        %v409 = vmul.f32 %v235, %v343
        %s410 = scalar_lea.vmem [#allocation4], 224
        %411 = vst [vmem:[%s410] sm:$0xff] %v406
        %412 = vst [vmem:[%s410 + $0x8] sm:$0xff] %v407
        %413 = vst [vmem:[%s410 + $0x10] sm:$0xff] %v408
        %414 = vst [vmem:[%s410 + $0x18] sm:$0xff] %v409
        %s415 = smul.u32 1, 32
        %s416 = smul.u32 %s415, 1
        %s417 = sshll.u32 %s416, 4
        %418 = dma.done %s81, %s417
        %v419 = vld [vmem:[#allocation3] sm:$0xff]
        %v420 = vld [vmem:[#allocation3 + $0x8] sm:$0xff]
        %v421 = vld [vmem:[#allocation3 + $0x10] sm:$0xff]
        %v422 = vld [vmem:[#allocation3 + $0x18] sm:$0xff]
        %v423 = vmul.f32 %v320, %v340
        %v424 = vmul.f32 %v321, %v341
        %v425 = vmul.f32 %v322, %v342
        %v426 = vmul.f32 %v323, %v343
        %v427 = vsub.f32 1.0, %v423
        %v428 = vsub.f32 1.0, %v424
        %v429 = vsub.f32 1.0, %v425
        %v430 = vsub.f32 1.0, %v426
        %v431 = vmul.f32 %v427, %v419
        %v432 = vmul.f32 %v428, %v420
        %v433 = vmul.f32 %v429, %v421
        %v434 = vmul.f32 %v430, %v422
        %v435 = vrot.slane %v419, 1
        %v436 = vrot.slane %v420, 1
        %v437 = vrot.slane %v421, 1
        %v438 = vrot.slane %v422, 1
        %v439 = vsel %vm107, %v437, %v438
        %v440 = vsel %vm107, %v436, %v437
        %v441 = vsel %vm107, %v435, %v436
        %v442 = vsel %vm107, %v438, %v435
        %v443 = vrot.slane %v419, 7
        %v444 = vrot.slane %v420, 7
        %v445 = vrot.slane %v421, 7
        %v446 = vrot.slane %v422, 7
        %v447 = vsel %vm189, %v445, %v446
        %v448 = vsel %vm189, %v444, %v445
        %v449 = vsel %vm189, %v443, %v444
        %v450 = vsel %vm189, %v446, %v443
        %v451 = vld [vmem:[#allocation4] sm:$0xff]
        %v452 = vld [vmem:[#allocation4 + $0x8] sm:$0xff]
        %v453 = vld [vmem:[#allocation4 + $0x10] sm:$0xff]
        %v454 = vld [vmem:[#allocation4 + $0x18] sm:$0xff]
        %455 = vrot.lane.b32.xlu0 %v441, 127
        %v456 = vpop.permute.xlu0 %455
        %457 = vrot.lane.b32.xlu0 %v440, 127
        %v458 = vpop.permute.xlu0 %457
        %459 = vrot.lane.b32.xlu0 %v439, 127
        %v460 = vpop.permute.xlu0 %459
        %461 = vrot.lane.b32.xlu0 %v442, 127
        %v462 = vpop.permute.xlu0 %461
        %v463 = vmul.f32 %v451, %v456
        %v464 = vmul.f32 %v452, %v458
        %v465 = vmul.f32 %v453, %v460
        %v466 = vmul.f32 %v454, %v462
        %v467 = vld [vmem:[%s356] sm:$0xff]
        %v468 = vld [vmem:[%s356 + $0x8] sm:$0xff]
        %v469 = vld [vmem:[%s356 + $0x10] sm:$0xff]
        %v470 = vld [vmem:[%s356 + $0x18] sm:$0xff]
        %v471 = vmul.f32 %v467, %v441
        %v472 = vmul.f32 %v468, %v440
        %v473 = vmul.f32 %v469, %v439
        %v474 = vmul.f32 %v470, %v442
        %v475 = vadd.f32 %v463, %v471
        %v476 = vadd.f32 %v464, %v472
        %v477 = vadd.f32 %v465, %v473
        %v478 = vadd.f32 %v466, %v474
        %v479 = vld [vmem:[%s365] sm:$0xff]
        %v480 = vld [vmem:[%s365 + $0x8] sm:$0xff]
        %v481 = vld [vmem:[%s365 + $0x10] sm:$0xff]
        %v482 = vld [vmem:[%s365 + $0x18] sm:$0xff]
        %483 = vrot.lane.b32.xlu0 %v441, 1
        %v484 = vpop.permute.xlu0 %483
        %485 = vrot.lane.b32.xlu0 %v440, 1
        %v486 = vpop.permute.xlu0 %485
        %487 = vrot.lane.b32.xlu0 %v439, 1
        %v488 = vpop.permute.xlu0 %487
        %489 = vrot.lane.b32.xlu0 %v442, 1
        %v490 = vpop.permute.xlu0 %489
        %v491 = vmul.f32 %v479, %v484
        %v492 = vmul.f32 %v480, %v486
        %v493 = vmul.f32 %v481, %v488
        %v494 = vmul.f32 %v482, %v490
        %v495 = vld [vmem:[%s374] sm:$0xff]
        %v496 = vld [vmem:[%s374 + $0x8] sm:$0xff]
        %v497 = vld [vmem:[%s374 + $0x10] sm:$0xff]
        %v498 = vld [vmem:[%s374 + $0x18] sm:$0xff]
        %499 = vrot.lane.b32.xlu0 %v419, 127
        %v500 = vpop.permute.xlu0 %499
        %501 = vrot.lane.b32.xlu0 %v420, 127
        %v502 = vpop.permute.xlu0 %501
        %503 = vrot.lane.b32.xlu0 %v421, 127
        %v504 = vpop.permute.xlu0 %503
        %505 = vrot.lane.b32.xlu0 %v422, 127
        %v506 = vpop.permute.xlu0 %505
        %v507 = vmul.f32 %v495, %v500
        %v508 = vmul.f32 %v496, %v502
        %v509 = vmul.f32 %v497, %v504
        %v510 = vmul.f32 %v498, %v506
        %v511 = vadd.f32 %v491, %v507
        %v512 = vadd.f32 %v492, %v508
        %v513 = vadd.f32 %v493, %v509
        %v514 = vadd.f32 %v494, %v510
        %v515 = vadd.f32 %v475, %v511
        %v516 = vadd.f32 %v476, %v512
        %v517 = vadd.f32 %v477, %v513
        %v518 = vadd.f32 %v478, %v514
        %v519 = vld [vmem:[%s383] sm:$0xff]
        %v520 = vld [vmem:[%s383 + $0x8] sm:$0xff]
        %v521 = vld [vmem:[%s383 + $0x10] sm:$0xff]
        %v522 = vld [vmem:[%s383 + $0x18] sm:$0xff]
        %523 = vrot.lane.b32.xlu0 %v419, 1
        %v524 = vpop.permute.xlu0 %523
        %525 = vrot.lane.b32.xlu0 %v420, 1
        %v526 = vpop.permute.xlu0 %525
        %527 = vrot.lane.b32.xlu0 %v421, 1
        %v528 = vpop.permute.xlu0 %527
        %529 = vrot.lane.b32.xlu0 %v422, 1
        %v530 = vpop.permute.xlu0 %529
        %v531 = vmul.f32 %v519, %v524
        %v532 = vmul.f32 %v520, %v526
        %v533 = vmul.f32 %v521, %v528
        %v534 = vmul.f32 %v522, %v530
        %v535 = vld [vmem:[%s392] sm:$0xff]
        %v536 = vld [vmem:[%s392 + $0x8] sm:$0xff]
        %v537 = vld [vmem:[%s392 + $0x10] sm:$0xff]
        %v538 = vld [vmem:[%s392 + $0x18] sm:$0xff]
        %539 = vrot.lane.b32.xlu0 %v450, 127
        %v540 = vpop.permute.xlu0 %539
        %541 = vrot.lane.b32.xlu0 %v449, 127
        %v542 = vpop.permute.xlu0 %541
        %543 = vrot.lane.b32.xlu0 %v448, 127
        %v544 = vpop.permute.xlu0 %543
        %545 = vrot.lane.b32.xlu0 %v447, 127
        %v546 = vpop.permute.xlu0 %545
        %v547 = vmul.f32 %v535, %v540
        %v548 = vmul.f32 %v536, %v542
        %v549 = vmul.f32 %v537, %v544
        %v550 = vmul.f32 %v538, %v546
        %v551 = vadd.f32 %v531, %v547
        %v552 = vadd.f32 %v532, %v548
        %v553 = vadd.f32 %v533, %v549
        %v554 = vadd.f32 %v534, %v550
        %v555 = vld [vmem:[%s401] sm:$0xff]
        %v556 = vld [vmem:[%s401 + $0x8] sm:$0xff]
        %v557 = vld [vmem:[%s401 + $0x10] sm:$0xff]
        %v558 = vld [vmem:[%s401 + $0x18] sm:$0xff]
        %v559 = vmul.f32 %v555, %v450
        %v560 = vmul.f32 %v556, %v449
        %v561 = vmul.f32 %v557, %v448
        %v562 = vmul.f32 %v558, %v447
        %v563 = vld [vmem:[%s410] sm:$0xff]
        %v564 = vld [vmem:[%s410 + $0x8] sm:$0xff]
        %v565 = vld [vmem:[%s410 + $0x10] sm:$0xff]
        %v566 = vld [vmem:[%s410 + $0x18] sm:$0xff]
        %567 = vrot.lane.b32.xlu0 %v450, 1
        %v568 = vpop.permute.xlu0 %567
        %569 = vrot.lane.b32.xlu0 %v449, 1
        %v570 = vpop.permute.xlu0 %569
        %571 = vrot.lane.b32.xlu0 %v448, 1
        %v572 = vpop.permute.xlu0 %571
        %573 = vrot.lane.b32.xlu0 %v447, 1
        %v574 = vpop.permute.xlu0 %573
        %v575 = vmul.f32 %v563, %v568
        %v576 = vmul.f32 %v564, %v570
        %v577 = vmul.f32 %v565, %v572
        %v578 = vmul.f32 %v566, %v574
        %v579 = vadd.f32 %v559, %v575
        %v580 = vadd.f32 %v560, %v576
        %v581 = vadd.f32 %v561, %v577
        %v582 = vadd.f32 %v562, %v578
        %v583 = vadd.f32 %v551, %v579
        %v584 = vadd.f32 %v552, %v580
        %v585 = vadd.f32 %v553, %v581
        %v586 = vadd.f32 %v554, %v582
        %v587 = vadd.f32 %v515, %v583
        %v588 = vadd.f32 %v516, %v584
        %v589 = vadd.f32 %v517, %v585
        %v590 = vadd.f32 %v518, %v586
        %v591 = vadd.f32 %v431, %v587
        %v592 = vadd.f32 %v432, %v588
        %v593 = vadd.f32 %v433, %v589
        %v594 = vadd.f32 %v434, %v590
        %v595 = vrot.slane %v591, 1
        %v596 = vrot.slane %v592, 1
        %v597 = vrot.slane %v593, 1
        %v598 = vrot.slane %v594, 1
        %v599 = vsel %vm107, %v597, %v598
        %v600 = vsel %vm107, %v596, %v597
        %v601 = vsel %vm107, %v595, %v596
        %v602 = vsel %vm107, %v598, %v595
        %v603 = vrot.slane %v591, 7
        %v604 = vrot.slane %v592, 7
        %v605 = vrot.slane %v593, 7
        %v606 = vrot.slane %v594, 7
        %v607 = vsel %vm189, %v605, %v606
        %v608 = vsel %vm189, %v604, %v605
        %v609 = vsel %vm189, %v603, %v604
        %v610 = vsel %vm189, %v606, %v603
        %611 = vrot.lane.b32.xlu0 %v601, 127
        %v612 = vpop.permute.xlu0 %611
        %613 = vrot.lane.b32.xlu0 %v600, 127
        %v614 = vpop.permute.xlu0 %613
        %615 = vrot.lane.b32.xlu0 %v599, 127
        %v616 = vpop.permute.xlu0 %615
        %617 = vrot.lane.b32.xlu0 %v602, 127
        %v618 = vpop.permute.xlu0 %617
        %v619 = vmul.f32 %v451, %v612
        %v620 = vmul.f32 %v452, %v614
        %v621 = vmul.f32 %v453, %v616
        %v622 = vmul.f32 %v454, %v618
        %v623 = vmul.f32 %v467, %v601
        %v624 = vmul.f32 %v468, %v600
        %v625 = vmul.f32 %v469, %v599
        %v626 = vmul.f32 %v470, %v602
        %v627 = vadd.f32 %v619, %v623
        %v628 = vadd.f32 %v620, %v624
        %v629 = vadd.f32 %v621, %v625
        %v630 = vadd.f32 %v622, %v626
        %631 = vrot.lane.b32.xlu0 %v601, 1
        %v632 = vpop.permute.xlu0 %631
        %633 = vrot.lane.b32.xlu0 %v600, 1
        %v634 = vpop.permute.xlu0 %633
        %635 = vrot.lane.b32.xlu0 %v599, 1
        %v636 = vpop.permute.xlu0 %635
        %637 = vrot.lane.b32.xlu0 %v602, 1
        %v638 = vpop.permute.xlu0 %637
        %v639 = vmul.f32 %v479, %v632
        %v640 = vmul.f32 %v480, %v634
        %v641 = vmul.f32 %v481, %v636
        %v642 = vmul.f32 %v482, %v638
        %643 = vrot.lane.b32.xlu0 %v591, 127
        %v644 = vpop.permute.xlu0 %643
        %645 = vrot.lane.b32.xlu0 %v592, 127
        %v646 = vpop.permute.xlu0 %645
        %647 = vrot.lane.b32.xlu0 %v593, 127
        %v648 = vpop.permute.xlu0 %647
        %649 = vrot.lane.b32.xlu0 %v594, 127
        %v650 = vpop.permute.xlu0 %649
        %v651 = vmul.f32 %v495, %v644
        %v652 = vmul.f32 %v496, %v646
        %v653 = vmul.f32 %v497, %v648
        %v654 = vmul.f32 %v498, %v650
        %v655 = vadd.f32 %v639, %v651
        %v656 = vadd.f32 %v640, %v652
        %v657 = vadd.f32 %v641, %v653
        %v658 = vadd.f32 %v642, %v654
        %v659 = vadd.f32 %v627, %v655
        %v660 = vadd.f32 %v628, %v656
        %v661 = vadd.f32 %v629, %v657
        %v662 = vadd.f32 %v630, %v658
        %663 = vrot.lane.b32.xlu0 %v591, 1
        %v664 = vpop.permute.xlu0 %663
        %665 = vrot.lane.b32.xlu0 %v592, 1
        %v666 = vpop.permute.xlu0 %665
        %667 = vrot.lane.b32.xlu0 %v593, 1
        %v668 = vpop.permute.xlu0 %667
        %669 = vrot.lane.b32.xlu0 %v594, 1
        %v670 = vpop.permute.xlu0 %669
        %v671 = vmul.f32 %v519, %v664
        %v672 = vmul.f32 %v520, %v666
        %v673 = vmul.f32 %v521, %v668
        %v674 = vmul.f32 %v522, %v670
        %675 = vrot.lane.b32.xlu0 %v610, 127
        %v676 = vpop.permute.xlu0 %675
        %677 = vrot.lane.b32.xlu0 %v609, 127
        %v678 = vpop.permute.xlu0 %677
        %679 = vrot.lane.b32.xlu0 %v608, 127
        %v680 = vpop.permute.xlu0 %679
        %681 = vrot.lane.b32.xlu0 %v607, 127
        %v682 = vpop.permute.xlu0 %681
        %v683 = vmul.f32 %v535, %v676
        %v684 = vmul.f32 %v536, %v678
        %v685 = vmul.f32 %v537, %v680
        %v686 = vmul.f32 %v538, %v682
        %v687 = vadd.f32 %v671, %v683
        %v688 = vadd.f32 %v672, %v684
        %v689 = vadd.f32 %v673, %v685
        %v690 = vadd.f32 %v674, %v686
        %v691 = vmul.f32 %v555, %v610
        %v692 = vmul.f32 %v556, %v609
        %v693 = vmul.f32 %v557, %v608
        %v694 = vmul.f32 %v558, %v607
        %695 = vrot.lane.b32.xlu0 %v610, 1
        %v696 = vpop.permute.xlu0 %695
        %697 = vrot.lane.b32.xlu0 %v609, 1
        %v698 = vpop.permute.xlu0 %697
        %699 = vrot.lane.b32.xlu0 %v608, 1
        %v700 = vpop.permute.xlu0 %699
        %701 = vrot.lane.b32.xlu0 %v607, 1
        %v702 = vpop.permute.xlu0 %701
        %v703 = vmul.f32 %v563, %v696
        %v704 = vmul.f32 %v564, %v698
        %v705 = vmul.f32 %v565, %v700
        %v706 = vmul.f32 %v566, %v702
        %v707 = vadd.f32 %v691, %v703
        %v708 = vadd.f32 %v692, %v704
        %v709 = vadd.f32 %v693, %v705
        %v710 = vadd.f32 %v694, %v706
        %v711 = vadd.f32 %v687, %v707
        %v712 = vadd.f32 %v688, %v708
        %v713 = vadd.f32 %v689, %v709
        %v714 = vadd.f32 %v690, %v710
        %v715 = vadd.f32 %v659, %v711
        %v716 = vadd.f32 %v660, %v712
        %v717 = vadd.f32 %v661, %v713
        %v718 = vadd.f32 %v662, %v714
        %v719 = vadd.f32 %v431, %v715
        %v720 = vadd.f32 %v432, %v716
        %v721 = vadd.f32 %v433, %v717
        %v722 = vadd.f32 %v434, %v718
        %v723 = vrot.slane %v720, 1
        %v724 = vrot.slane %v721, 1
        %v725 = vrot.slane %v722, 1
        %v726 = vsel %vm107, %v724, %v725
        %v727 = vsel %vm107, %v723, %v724
        %v728 = vrot.slane %v719, 7
        %v729 = vrot.slane %v720, 7
        %v730 = vrot.slane %v721, 7
        %v731 = vsel %vm189, %v729, %v730
        %v732 = vsel %vm189, %v728, %v729
        %733 = vrot.lane.b32.xlu0 %v727, 127
        %v734 = vpop.permute.xlu0 %733
        %735 = vrot.lane.b32.xlu0 %v726, 127
        %v736 = vpop.permute.xlu0 %735
        %v737 = vmul.f32 %v452, %v734
        %v738 = vmul.f32 %v453, %v736
        %v739 = vmul.f32 %v468, %v727
        %v740 = vmul.f32 %v469, %v726
        %v741 = vadd.f32 %v737, %v739
        %v742 = vadd.f32 %v738, %v740
        %743 = vrot.lane.b32.xlu0 %v727, 1
        %v744 = vpop.permute.xlu0 %743
        %745 = vrot.lane.b32.xlu0 %v726, 1
        %v746 = vpop.permute.xlu0 %745
        %v747 = vmul.f32 %v480, %v744
        %v748 = vmul.f32 %v481, %v746
        %749 = vrot.lane.b32.xlu0 %v720, 127
        %v750 = vpop.permute.xlu0 %749
        %751 = vrot.lane.b32.xlu0 %v721, 127
        %v752 = vpop.permute.xlu0 %751
        %v753 = vmul.f32 %v496, %v750
        %v754 = vmul.f32 %v497, %v752
        %v755 = vadd.f32 %v747, %v753
        %v756 = vadd.f32 %v748, %v754
        %v757 = vadd.f32 %v741, %v755
        %v758 = vadd.f32 %v742, %v756
        %759 = vrot.lane.b32.xlu0 %v720, 1
        %v760 = vpop.permute.xlu0 %759
        %761 = vrot.lane.b32.xlu0 %v721, 1
        %v762 = vpop.permute.xlu0 %761
        %v763 = vmul.f32 %v520, %v760
        %v764 = vmul.f32 %v521, %v762
        %765 = vrot.lane.b32.xlu0 %v732, 127
        %v766 = vpop.permute.xlu0 %765
        %767 = vrot.lane.b32.xlu0 %v731, 127
        %v768 = vpop.permute.xlu0 %767
        %v769 = vmul.f32 %v536, %v766
        %v770 = vmul.f32 %v537, %v768
        %v771 = vadd.f32 %v763, %v769
        %v772 = vadd.f32 %v764, %v770
        %v773 = vmul.f32 %v556, %v732
        %v774 = vmul.f32 %v557, %v731
        %775 = vrot.lane.b32.xlu0 %v732, 1
        %v776 = vpop.permute.xlu0 %775
        %777 = vrot.lane.b32.xlu0 %v731, 1
        %v778 = vpop.permute.xlu0 %777
        %v779 = vmul.f32 %v564, %v776
        %v780 = vmul.f32 %v565, %v778
        %v781 = vadd.f32 %v773, %v779
        %v782 = vadd.f32 %v774, %v780
        %v783 = vadd.f32 %v771, %v781
        %v784 = vadd.f32 %v772, %v782
        %v785 = vadd.f32 %v757, %v783
        %v786 = vadd.f32 %v758, %v784
        %v787 = vadd.f32 %v432, %v785
        %v788 = vadd.f32 %v433, %v786
        %789 = vst [vmem:[%s59] sm:$0xff] %v787
        %790 = vst [vmem:[%s59 + $0x8] sm:$0xff] %v788
        %s791 = sand.u32 %s32, 1
        %s792 = scalar_lea.sflag [#allocation7], %s791
        %s793 = sand.u32 %s32, 1
        %s794 = smul.addr %s793, 16
        %s795 = scalar_lea.vmem [#allocation6], %s794
        // Predicated region
        $region21: #{tpu_custom_call.1} parent=11 // pred_check
          %p796 = pneg %p38
        $region22: #{tpu_custom_call.1} parent=11 // pred_check_branch
          %798 = sbr.rel (%p796) target = $region24
        $region23: #{tpu_custom_call.1} parent=11 // pred_region
          %s799 = smul.u32 2, %s18
          %s801 = ssub.s32 256, 256
          %802 = vsyncadd %s792, %s801
          %s803 = smul.addr %s17, 2
          %s804 = sadd.s32 %s799, %s803
          %s805 = smul.addr %s804, 128
          %s806 = scalar_lea.hbm %s2, %s805
          %s807 = sshll.u32 %s795, 4
          %s808 = int_to_ptr.vmem [resolvable:$true] %s807
          %813 = dma.vmem_to_hbm [thread:$0]  %s808, 256, %s806, %s792, 128, 128, 8
        $region24: #{tpu_custom_call.1} parent=11 // pred_fallthru
          _
      $region12: #{tpu_custom_call.1} parent=5 // pred_fallthru
        _
      %p814 = scmp.le.s32.totalorder 1, %s11
      // Predicated region
      $region25: #{tpu_custom_call.1} parent=5 // pred_check
        %p815 = pneg %p814
      $region26: #{tpu_custom_call.1} parent=5 // pred_check_branch
        %817 = sbr.rel (%p815) target = $region28
      $region27: #{tpu_custom_call.1} parent=5 // pred_region
        %s818 = ssub.s32 %s11, 1
        // Predicated region
        $region29: #{tpu_custom_call.1} parent=27 // pred_check
          %p819 = pneg %p44
        $region30: #{tpu_custom_call.1} parent=27 // pred_check_branch
          %821 = sbr.rel (%p819) target = $region32
        $region31: #{tpu_custom_call.1} parent=27 // pred_region
          %s822 = sand.u32 %s35, 1
          %s823 = scalar_lea.sflag [#allocation7], %s822
          %s824 = sand.u32 %s35, 1
          %s825 = smul.addr %s824, 16
          %s826 = scalar_lea.vmem [#allocation6], %s825
          %827 = dma.done %s823, 256
        $region32: #{tpu_custom_call.1} parent=27 // pred_fallthru
          _
      $region28: #{tpu_custom_call.1} parent=5 // pred_fallthru
        _
    $region6: #{tpu_custom_call.1} parent=1 // loop_footer
      %s15 = sadd.s32 1, %s11
    $region7: #{tpu_custom_call.1} parent=1 // loop_footer_branch
      %10 = sbr.rel target = $region3
    $region8: #{tpu_custom_call.1} parent=1 // loop_exit
      _
    %828 = vsyncpa [#allocation7], 1
    %s829 = scalar_lea.sflag [#allocation7], 1
    %830 = vsyncpa %s829, 1
  %831 = vsyncmov [#allocation5]
  %s832 = vpop.sfrf %831
  %p833 = scmp.eq.s32.totalorder %s832, 0
  %p834 = pneg %p833
  %836 = shalt.err (%p834)
  %s837 = scalar_lea.sflag [#allocation5], 1
  %838 = vsyncmov %s837
  %s839 = vpop.sfrf %838
  %p840 = scmp.eq.s32.totalorder %s839, 0
  %p841 = pneg %p840
  %843 = shalt.err (%p841)

</llo_original>
